<compile_context>
chip_gen: v5e
topology: v5e:2x2
jax: 0.10.0
libtpu: 0.0.40
codegen_flags: <defaults>
</compile_context>

<pallas_src>
import functools

import numpy as np
import jax
import jax.numpy as jnp
from jax import lax
from jax.experimental import pallas as pl
from jax.experimental.pallas import tpu as pltpu

# ----- stand-ins for the original `config` object -----
S_NLAYERS = 1          # config.s_nlayers  (only 1 LSTM layer supported here)
S_NHIDDEN = 32         # config.s_nhidden
RANK_FEATURE_SIZE = 8  # config.rank_feature_size
BI = True              # config.bi  (forward() reshape requires bidirectional)
# TODO(synk): S_NLAYERS > 1 (stacked LSTM) not implemented; the reference forward
# only exercises a single bidirectional layer's output layout.


def iobm_kernel(list_size, click_dim, hidden,
                pos_ids_ref, click_ids_ref, context_ref,
                emb_tab_ref,
                intra_wc_ref, intra_ws_ref, intra_b_ref,
                wx_ref, wh_ref, b_pack_ref,
                inter_wc_ref, inter_ws_ref, inter_b_ref,
                out_w_ref, out_b_ref,
                o_ref,
                seq2_ref):
    f32 = jnp.float32
    bs = pos_ids_ref.shape[0]
    L = list_size
    H = hidden
    in_dim = 2 * click_dim
    n_emb = L + 2

    # ---- context mean over items -> (bs, ctx_dim) ----
    ctx_mean = jnp.mean(context_ref[...], axis=1)

    # ---- fused position+click embedding lookup: one-hot @ block table ----
    pos_ids = pos_ids_ref[...]                         # (bs, L) int32
    click_ids = click_ids_ref[...]                     # (bs, L) int32
    col = lax.broadcasted_iota(jnp.int32, (bs, L, n_emb), 2)
    onehot = ((col == pos_ids[..., None]) |
              (col == (click_ids + L)[..., None])).astype(f32)
    seq1_2d = jnp.dot(onehot.reshape(bs * L, n_emb), emb_tab_ref[...],
                      preferred_element_type=f32)      # (bs*L, in_dim)
    seq1 = seq1_2d.reshape(bs, L, in_dim)

    # ---- intra additive attention (context term hoisted off the L axis) ----
    ctx_intra = jnp.dot(ctx_mean, intra_wc_ref[...],
                        preferred_element_type=f32)    # (bs, in_dim)
    z = jnp.dot(seq1_2d, intra_ws_ref[...], preferred_element_type=f32)
    z = jnp.tanh(z.reshape(bs, L, in_dim) + ctx_intra[:, None, :]
                 + intra_b_ref[...])
    z = z - jnp.max(z, axis=-1, keepdims=True)
    e = jnp.exp(z)
    p = e * pl.reciprocal(jnp.sum(e, axis=-1, keepdims=True), approx=True)
    att1 = (p * float(in_dim)) * seq1                  # (bs, L, in_dim)

    # ---- hoisted LSTM input projection: both directions, all steps, 1 matmul
    xg = jnp.dot(att1.reshape(bs * L, in_dim), wx_ref[...],
                 preferred_element_type=f32).reshape(bs, L, 8 * H)

    # ---- fused bidirectional recurrence (fully unrolled, L steps) ----
    wh = wh_ref[...]                                   # (2H, 8H) block-diag
    b_f = b_pack_ref[0:1, :]                           # (1, 4H), gates [i|f|o|g]
    b_b = b_pack_ref[1:2, :]

    def cell(gates, c):
        sg = jax.nn.sigmoid(gates[:, :3 * H])
        gg = jnp.tanh(gates[:, 3 * H:])
        i, f, o = sg[:, :H], sg[:, H:2 * H], sg[:, 2 * H:]
        c_new = f * c + i * gg
        return o * jnp.tanh(c_new), c_new

    h_f = jnp.zeros((bs, H), f32)
    h_b = jnp.zeros((bs, H), f32)
    c_f = jnp.zeros((bs, H), f32)
    c_b = jnp.zeros((bs, H), f32)

    # step s: fwd consumes x[s], bwd consumes x[T-1-s]; x[0] = x[T-1] = 0, so
    # only the first L steps produce the outputs the reference actually uses.
    for s in range(L):
        if s == 0:
            gates_f = jnp.broadcast_to(b_f, (bs, 4 * H))
            gates_b = jnp.broadcast_to(b_b, (bs, 4 * H))
        else:
            h_cat = jnp.concatenate([h_f, h_b], axis=-1)        # (bs, 2H)
            g8 = jnp.dot(h_cat, wh, preferred_element_type=f32)  # (bs, 8H)
            gates_f = g8[:, :4 * H] + xg[:, s - 1, :4 * H] + b_f
            gates_b = g8[:, 4 * H:] + xg[:, L - s, 4 * H:] + b_b
        h_f, c_f = cell(gates_f, c_f)
        h_b, c_b = cell(gates_b, c_b)
        # fwd hidden of step s -> output position s; bwd hidden of step s is
        # the state at time T-1-s, which the reference places at L-1-s.
        seq2_ref[:, s, 0:H] = h_f
        seq2_ref[:, L - 1 - s, H:2 * H] = h_b

    seq2 = seq2_ref[...]                               # (bs, L, 2H)
    seq2_2d = seq2.reshape(bs * L, 2 * H)

    # ---- inter additive attention ----
    ctx_inter = jnp.dot(ctx_mean, inter_wc_ref[...],
                        preferred_element_type=f32)    # (bs, 2H)
    z2 = jnp.dot(seq2_2d, inter_ws_ref[...], preferred_element_type=f32)
    z2 = jnp.tanh(z2.reshape(bs, L, 2 * H) + ctx_inter[:, None, :]
                  + inter_b_ref[...])
    z2 = z2 - jnp.max(z2, axis=-1, keepdims=True)
    e2 = jnp.exp(z2)
    p2 = e2 * pl.reciprocal(jnp.sum(e2, axis=-1, keepdims=True), approx=True)
    att2 = (p2 * float(2 * H)) * seq2                  # (bs, L, 2H)

    # ---- final (2H -> 1) projection as VPU multiply + lane reduce ----
    o_ref[...] = jnp.sum(att2 * out_w_ref[...], axis=-1) + out_b_ref[...]


def _pack_params(params, *, list_size, click_dim, ctx_dim, hidden):
    """One-time repack of PyTorch-style parameters into kernel-friendly layouts."""
    (pos_tab, click_tab, intra_w, intra_b, wih_f, whh_f, b_f,
     wih_b, whh_b, b_b, inter_w, inter_b, out_w, out_b) = params
    f32 = jnp.float32
    L, H, cd = list_size, hidden, click_dim

    # combined embedding table: row j<L -> [pos_tab[j], 0]; row L+c -> [0, click_tab[c]]
    emb_tab = jnp.concatenate([
        jnp.concatenate([pos_tab, jnp.zeros((L, cd), f32)], axis=1),
        jnp.concatenate([jnp.zeros((2, cd), f32), click_tab], axis=1)], axis=0)

    # split attention weights into context / sequence parts (ctx term hoisted)
    intra_wc, intra_ws = intra_w[:ctx_dim], intra_w[ctx_dim:]
    inter_wc, inter_ws = inter_w[:ctx_dim], inter_w[ctx_dim:]

    def reord(w):   # LSTM gate columns [i|f|g|o] -> [i|f|o|g]
        return jnp.concatenate(
            [w[..., :2 * H], w[..., 3 * H:], w[..., 2 * H:3 * H]], axis=-1)

    # input projection for both directions packed side by side  (in_dim, 8H)
    wx_pack = jnp.concatenate([reord(wih_f), reord(wih_b)], axis=1)
    # block-diagonal recurrence weight: [h_f | h_b] @ wh -> [fwd gates | bwd gates]
    zeros_h = jnp.zeros((H, 4 * H), f32)
    wh_pack = jnp.concatenate([
        jnp.concatenate([reord(whh_f), zeros_h], axis=1),
        jnp.concatenate([zeros_h, reord(whh_b)], axis=1)], axis=0)   # (2H, 8H)
    b_pack = jnp.concatenate([reord(b_f), reord(b_b)], axis=0)       # (2, 4H)

    return (emb_tab, intra_wc, intra_ws, intra_b,
            wx_pack, wh_pack, b_pack,
            inter_wc, inter_ws, inter_b, out_w.T, out_b)


def iobm_forward(pos_input, click_input, context_input, params,
                 *, list_size, click_dim, ctx_dim, hidden):
    bs = pos_input.shape[0]
    L = list_size
    weights = _pack_params(params, list_size=list_size, click_dim=click_dim,
                           ctx_dim=ctx_dim, hidden=hidden)

    # batch-parallel grid (keeps v7x's second TensorCore busy for big batches)
    bs_tile = 8 if bs % 8 == 0 else bs
    grid = (bs // bs_tile,)

    kernel = functools.partial(iobm_kernel, list_size, click_dim, hidden)
    data_specs = [
        pl.BlockSpec((bs_tile, L), lambda b: (b, 0)),
        pl.BlockSpec((bs_tile, L), lambda b: (b, 0)),
        pl.BlockSpec((bs_tile, L, ctx_dim), lambda b: (b, 0, 0)),
    ]
    weight_specs = [pl.BlockSpec(w.shape, lambda b, nd=w.ndim: (0,) * nd)
                    for w in weights]

    return pl.pallas_call(
        kernel,
        out_shape=jax.ShapeDtypeStruct((bs, L), jnp.float32),
        grid=grid,
        in_specs=data_specs + weight_specs,
        out_specs=pl.BlockSpec((bs_tile, L), lambda b: (b, 0)),
        scratch_shapes=[pltpu.VMEM((bs_tile, L, 2 * hidden), jnp.float32)],
        compiler_params=pltpu.CompilerParams(
            dimension_semantics=("parallel",)),
    )(pos_input, click_input, context_input, *weights)


# ------------------------- pure-JAX reference -------------------------
def iobm_reference(pos_input, click_input, context_input, params,
                   list_size, click_dim, ctx_dim, hidden):
    (pos_tab, click_tab, intra_w, intra_b, wih_f, whh_f, b_f,
     wih_b, whh_b, b_b, inter_w, inter_b, out_w, out_b) = params
    hp = lax.Precision.HIGHEST
    bs, L, H, in_dim = pos_input.shape[0], list_size, hidden, 2 * click_dim

    ctx_rep = jnp.broadcast_to(jnp.mean(context_input, axis=1, keepdims=True),
                               (bs, L, ctx_dim))
    seq1 = jnp.concatenate([pos_tab[pos_input], click_tab[click_input]], -1)
    z = jnp.tanh(jnp.einsum('bld,do->blo', jnp.concatenate([ctx_rep, seq1], -1),
                            intra_w, precision=hp) + intra_b)
    att1 = jax.nn.softmax(z, -1) * in_dim * seq1
    zeros = jnp.zeros((bs, 1, in_dim), jnp.float32)
    x = jnp.concatenate([zeros, att1, zeros], axis=1)          # (bs, T, in_dim)
    x_tm = jnp.transpose(x, (1, 0, 2))                         # (T, bs, in_dim)

    def make_cell(wih, whh, b):
        def cell(carry, x_t):
            h, c = carry
            g = (jnp.dot(x_t, wih, precision=hp) + jnp.dot(h, whh, precision=hp) + b)
            i = jax.nn.sigmoid(g[:, :H]); f = jax.nn.sigmoid(g[:, H:2 * H])
            gg = jnp.tanh(g[:, 2 * H:3 * H]); o = jax.nn.sigmoid(g[:, 3 * H:])
            c = f * c + i * gg
            h = o * jnp.tanh(c)
            return (h, c), h
        return cell

    init = (jnp.zeros((bs, H)), jnp.zeros((bs, H)))
    _, fwd = lax.scan(make_cell(wih_f, whh_f, b_f), init, x_tm)
    _, bwd_rev = lax.scan(make_cell(wih_b, whh_b, b_b), init, x_tm[::-1])
    bwd = bwd_rev[::-1]
    fwd_o = jnp.transpose(fwd, (1, 0, 2))
    bwd_o = jnp.transpose(bwd, (1, 0, 2))
    seq2 = jnp.concatenate([fwd_o[:, :L, :], bwd_o[:, 2:, :]], -1)
    z2 = jnp.tanh(jnp.einsum('bld,do->blo', jnp.concatenate([ctx_rep, seq2], -1),
                             inter_w, precision=hp) + inter_b)
    att2 = jax.nn.softmax(z2, -1) * (2 * H) * seq2
    out = jnp.einsum('blo,oz->blz', att2, out_w, precision=hp) + out_b
    return out[..., 0]


def init_params(key, list_size, click_dim, ctx_dim, hidden):
    in_dim = 2 * click_dim
    intra_dim = in_dim + ctx_dim
    inter_dim = 2 * hidden + ctx_dim
    ks = jax.random.split(key, 14)
    s = 0.1
    nrm = lambda k, shp: (jax.random.normal(k, shp, jnp.float32) * s)
    return (
        nrm(ks[0], (list_size, click_dim)),     # pos_emb table
        nrm(ks[1], (2, click_dim)),             # click_emb table
        nrm(ks[2], (intra_dim, in_dim)),        # intra_w (pre-transposed)
        nrm(ks[3], (1, in_dim)),                # intra_b
        nrm(ks[4], (in_dim, 4 * hidden)),       # LSTM fwd W_ih^T  (gates i|f|g|o)
        nrm(ks[5], (hidden, 4 * hidden)),       # LSTM fwd W_hh^T
        nrm(ks[6], (1, 4 * hidden)),            # LSTM fwd bias (b_ih + b_hh)
        nrm(ks[7], (in_dim, 4 * hidden)),       # LSTM bwd W_ih^T
        nrm(ks[8], (hidden, 4 * hidden)),       # LSTM bwd W_hh^T
        nrm(ks[9], (1, 4 * hidden)),            # LSTM bwd bias
        nrm(ks[10], (inter_dim, 2 * hidden)),   # inter_w (pre-transposed)
        nrm(ks[11], (1, 2 * hidden)),           # inter_b
        nrm(ks[12], (2 * hidden, 1)),           # output W (pre-transposed)
        nrm(ks[13], (1, 1)),                    # output b
    )


if __name__ == "__main__":
    bs, list_size, click_dim = 2, 8, 4
    ctx_dim, hidden = RANK_FEATURE_SIZE, S_NHIDDEN

    key = jax.random.PRNGKey(0)
    k0, k1, k2 = jax.random.split(key, 3)
    pos_input = jnp.tile(jnp.arange(list_size, dtype=jnp.int32)[None, :], (bs, 1))
    click_input = jax.random.bernoulli(k0, 0.4, (bs, list_size)).astype(jnp.int32)
    context_input = jax.random.normal(k1, (bs, list_size, ctx_dim), jnp.float32)
    params = init_params(k2, list_size, click_dim, ctx_dim, hidden)

    out = iobm_forward(pos_input, click_input, context_input, params,
                       list_size=list_size, click_dim=click_dim,
                       ctx_dim=ctx_dim, hidden=hidden)
    out = jax.block_until_ready(out)

    ref = iobm_reference(pos_input, click_input, context_input, params,
                         list_size, click_dim, ctx_dim, hidden)
    np.testing.assert_allclose(np.asarray(out), np.asarray(ref),
                               rtol=2e-3, atol=2e-3)
    print("KERNEL_OK")
</pallas_src>

<mosaic_0001>
module attributes {stable_mosaic.version = 11 : i64} {
  func.func @iobm_kernel(%arg0: i32, %arg1: memref<2x8xi32, #tpu.memory_space<vmem>>, %arg2: memref<2x8xi32, #tpu.memory_space<vmem>>, %arg3: memref<2x8x8xf32, #tpu.memory_space<vmem>>, %arg4: memref<10x8xf32, #tpu.memory_space<vmem>>, %arg5: memref<8x8xf32, #tpu.memory_space<vmem>>, %arg6: memref<8x8xf32, #tpu.memory_space<vmem>>, %arg7: memref<1x8xf32, #tpu.memory_space<vmem>>, %arg8: memref<8x256xf32, #tpu.memory_space<vmem>>, %arg9: memref<64x256xf32, #tpu.memory_space<vmem>>, %arg10: memref<2x128xf32, #tpu.memory_space<vmem>>, %arg11: memref<8x64xf32, #tpu.memory_space<vmem>>, %arg12: memref<64x64xf32, #tpu.memory_space<vmem>>, %arg13: memref<1x64xf32, #tpu.memory_space<vmem>>, %arg14: memref<1x64xf32, #tpu.memory_space<vmem>>, %arg15: memref<1x1xf32, #tpu.memory_space<vmem>>, %arg16: memref<2x8xf32, #tpu.memory_space<vmem>>, %arg17: memref<2x8x64xf32, #tpu.memory_space<vmem>>) attributes {dimension_semantics = [#tpu.dimension_semantics<parallel>], iteration_bounds = array<i64: 1>, scalar_prefetch = 0 : i64, scratch_operands = 1 : i64, tpu.core_type = #tpu.core_type<tc>, window_params = [{transform_indices = @transform_0, window_bounds = array<i64: 2, 8>}, {transform_indices = @transform_1, window_bounds = array<i64: 2, 8>}, {transform_indices = @transform_2, window_bounds = array<i64: 2, 8, 8>}, {pipeline_mode = #tpu.pipeline_mode<synchronous>, transform_indices = @transform_3, window_bounds = array<i64: 10, 8>}, {pipeline_mode = #tpu.pipeline_mode<synchronous>, transform_indices = @transform_4, window_bounds = array<i64: 8, 8>}, {pipeline_mode = #tpu.pipeline_mode<synchronous>, transform_indices = @transform_5, window_bounds = array<i64: 8, 8>}, {pipeline_mode = #tpu.pipeline_mode<synchronous>, transform_indices = @transform_6, window_bounds = array<i64: 1, 8>}, {pipeline_mode = #tpu.pipeline_mode<synchronous>, transform_indices = @transform_7, window_bounds = array<i64: 8, 256>}, {pipeline_mode = #tpu.pipeline_mode<synchronous>, transform_indices = @transform_8, window_bounds = array<i64: 64, 256>}, {pipeline_mode = #tpu.pipeline_mode<synchronous>, transform_indices = @transform_9, window_bounds = array<i64: 2, 128>}, {pipeline_mode = #tpu.pipeline_mode<synchronous>, transform_indices = @transform_10, window_bounds = array<i64: 8, 64>}, {pipeline_mode = #tpu.pipeline_mode<synchronous>, transform_indices = @transform_11, window_bounds = array<i64: 64, 64>}, {pipeline_mode = #tpu.pipeline_mode<synchronous>, transform_indices = @transform_12, window_bounds = array<i64: 1, 64>}, {pipeline_mode = #tpu.pipeline_mode<synchronous>, transform_indices = @transform_13, window_bounds = array<i64: 1, 64>}, {pipeline_mode = #tpu.pipeline_mode<synchronous>, transform_indices = @transform_14, window_bounds = array<i64: 1, 1>}, {transform_indices = @transform_15, window_bounds = array<i64: 2, 8>}]} {
    %c0 = arith.constant 0 : index
    %c0_0 = arith.constant 0 : index
    %c0_1 = arith.constant 0 : index
    %0 = vector.load %arg3[%c0, %c0_0, %c0_1] : memref<2x8x8xf32, #tpu.memory_space<vmem>>, vector<2x8x8xf32>
    %cst = arith.constant dense<0.000000e+00> : vector<2x8xf32>
    %1 = vector.multi_reduction <add>, %0, %cst [1] : vector<2x8x8xf32> to vector<2x8xf32>
    %cst_2 = arith.constant 8.000000e+00 : f32
    %2 = vector.broadcast %cst_2 : f32 to vector<2x8xf32>
    %3 = arith.divf %1, %2 : vector<2x8xf32>
    %c0_3 = arith.constant 0 : index
    %c0_4 = arith.constant 0 : index
    %4 = vector.load %arg1[%c0_3, %c0_4] : memref<2x8xi32, #tpu.memory_space<vmem>>, vector<2x8xi32>
    %c0_5 = arith.constant 0 : index
    %c0_6 = arith.constant 0 : index
    %5 = vector.load %arg2[%c0_5, %c0_6] : memref<2x8xi32, #tpu.memory_space<vmem>>, vector<2x8xi32>
    %6 = tpu.iota {dimensions = array<i32: 2>} : vector<2x8x10xi32>
    %7 = vector.shape_cast %4 : vector<2x8xi32> to vector<2x8x1xi32>
    %8 = vector.broadcast %7 : vector<2x8x1xi32> to vector<2x8x10xi32>
    %9 = arith.cmpi eq, %6, %8 : vector<2x8x10xi32>
    %c8_i32 = arith.constant 8 : i32
    %10 = vector.broadcast %c8_i32 : i32 to vector<2x8xi32>
    %11 = arith.addi %5, %10 : vector<2x8xi32>
    %12 = vector.shape_cast %11 : vector<2x8xi32> to vector<2x8x1xi32>
    %13 = vector.broadcast %12 : vector<2x8x1xi32> to vector<2x8x10xi32>
    %14 = arith.cmpi eq, %6, %13 : vector<2x8x10xi32>
    %15 = arith.ori %9, %14 : vector<2x8x10xi1>
    %16 = arith.extui %15 : vector<2x8x10xi1> to vector<2x8x10xi32>
    %17 = arith.sitofp %16 : vector<2x8x10xi32> to vector<2x8x10xf32>
    %18 = vector.shape_cast %17 : vector<2x8x10xf32> to vector<16x10xf32>
    %c0_7 = arith.constant 0 : index
    %c0_8 = arith.constant 0 : index
    %19 = vector.load %arg4[%c0_7, %c0_8] : memref<10x8xf32, #tpu.memory_space<vmem>>, vector<10x8xf32>
    %cst_9 = arith.constant dense<0.000000e+00> : vector<16x8xf32>
    %20 = tpu.matmul %18, %19, %cst_9 {dimension_numbers = #tpu.dot_dimension_numbers<[1], [0], [0], [1], [0, 0, 1, 1], [], []>} : vector<16x10xf32>, vector<10x8xf32>, vector<16x8xf32> -> vector<16x8xf32>
    %21 = vector.shape_cast %20 : vector<16x8xf32> to vector<2x8x8xf32>
    %c0_10 = arith.constant 0 : index
    %c0_11 = arith.constant 0 : index
    %22 = vector.load %arg5[%c0_10, %c0_11] : memref<8x8xf32, #tpu.memory_space<vmem>>, vector<8x8xf32>
    %cst_12 = arith.constant dense<0.000000e+00> : vector<2x8xf32>
    %23 = tpu.matmul %3, %22, %cst_12 {dimension_numbers = #tpu.dot_dimension_numbers<[1], [0], [0], [1], [0, 0, 1, 1], [], []>} : vector<2x8xf32>, vector<8x8xf32>, vector<2x8xf32> -> vector<2x8xf32>
    %c0_13 = arith.constant 0 : index
    %c0_14 = arith.constant 0 : index
    %24 = vector.load %arg6[%c0_13, %c0_14] : memref<8x8xf32, #tpu.memory_space<vmem>>, vector<8x8xf32>
    %cst_15 = arith.constant dense<0.000000e+00> : vector<16x8xf32>
    %25 = tpu.matmul %20, %24, %cst_15 {dimension_numbers = #tpu.dot_dimension_numbers<[1], [0], [0], [1], [0, 0, 1, 1], [], []>} : vector<16x8xf32>, vector<8x8xf32>, vector<16x8xf32> -> vector<16x8xf32>
    %26 = vector.shape_cast %25 : vector<16x8xf32> to vector<2x8x8xf32>
    %27 = vector.shape_cast %23 : vector<2x8xf32> to vector<2x1x8xf32>
    %28 = vector.broadcast %27 : vector<2x1x8xf32> to vector<2x8x8xf32>
    %29 = arith.addf %26, %28 : vector<2x8x8xf32>
    %c0_16 = arith.constant 0 : index
    %c0_17 = arith.constant 0 : index
    %30 = vector.load %arg7[%c0_16, %c0_17] : memref<1x8xf32, #tpu.memory_space<vmem>>, vector<1x8xf32>
    %31 = vector.shape_cast %30 : vector<1x8xf32> to vector<1x1x8xf32>
    %32 = vector.broadcast %31 : vector<1x1x8xf32> to vector<2x8x8xf32>
    %33 = arith.addf %29, %32 : vector<2x8x8xf32>
    %34 = math.tanh %33 : vector<2x8x8xf32>
    %cst_18 = arith.constant dense<0xFF800000> : vector<2x8xf32>
    %35 = vector.multi_reduction <maximumf>, %34, %cst_18 [2] : vector<2x8x8xf32> to vector<2x8xf32>
    %36 = vector.shape_cast %35 : vector<2x8xf32> to vector<2x8x1xf32>
    %37 = vector.broadcast %36 : vector<2x8x1xf32> to vector<2x8x8xf32>
    %38 = arith.subf %34, %37 : vector<2x8x8xf32>
    %39 = math.exp %38 : vector<2x8x8xf32>
    %cst_19 = arith.constant dense<0.000000e+00> : vector<2x8xf32>
    %40 = vector.multi_reduction <add>, %39, %cst_19 [2] : vector<2x8x8xf32> to vector<2x8xf32>
    %41 = vector.shape_cast %40 : vector<2x8xf32> to vector<2x8x1xf32>
    %42 = tpu.reciprocal %41 {approx = true} : vector<2x8x1xf32> -> vector<2x8x1xf32>
    %43 = vector.broadcast %42 : vector<2x8x1xf32> to vector<2x8x8xf32>
    %44 = arith.mulf %39, %43 : vector<2x8x8xf32>
    %cst_20 = arith.constant 8.000000e+00 : f32
    %45 = vector.broadcast %cst_20 : f32 to vector<2x8x8xf32>
    %46 = arith.mulf %44, %45 : vector<2x8x8xf32>
    %47 = arith.mulf %46, %21 : vector<2x8x8xf32>
    %48 = vector.shape_cast %47 : vector<2x8x8xf32> to vector<16x8xf32>
    %c0_21 = arith.constant 0 : index
    %c0_22 = arith.constant 0 : index
    %49 = vector.load %arg8[%c0_21, %c0_22] : memref<8x256xf32, #tpu.memory_space<vmem>>, vector<8x256xf32>
    %cst_23 = arith.constant dense<0.000000e+00> : vector<16x256xf32>
    %50 = tpu.matmul %48, %49, %cst_23 {dimension_numbers = #tpu.dot_dimension_numbers<[1], [0], [0], [1], [0, 0, 1, 1], [], []>} : vector<16x8xf32>, vector<8x256xf32>, vector<16x256xf32> -> vector<16x256xf32>
    %51 = vector.shape_cast %50 : vector<16x256xf32> to vector<2x8x256xf32>
    %c0_24 = arith.constant 0 : index
    %c0_25 = arith.constant 0 : index
    %52 = vector.load %arg9[%c0_24, %c0_25] : memref<64x256xf32, #tpu.memory_space<vmem>>, vector<64x256xf32>
    %c0_26 = arith.constant 0 : index
    %c0_27 = arith.constant 0 : index
    %53 = vector.load %arg10[%c0_26, %c0_27] : memref<2x128xf32, #tpu.memory_space<vmem>>, vector<1x128xf32>
    %c1 = arith.constant 1 : index
    %c0_28 = arith.constant 0 : index
    %54 = vector.load %arg10[%c1, %c0_28] : memref<2x128xf32, #tpu.memory_space<vmem>>, vector<1x128xf32>
    %cst_29 = arith.constant 0.000000e+00 : f32
    %55 = vector.broadcast %cst_29 : f32 to vector<2x32xf32>
    %cst_30 = arith.constant 0.000000e+00 : f32
    %56 = vector.broadcast %cst_30 : f32 to vector<2x32xf32>
    %57 = vector.shape_cast %53 : vector<1x128xf32> to vector<1x128xf32>
    %58 = vector.broadcast %57 : vector<1x128xf32> to vector<2x128xf32>
    %59 = vector.shape_cast %54 : vector<1x128xf32> to vector<1x128xf32>
    %60 = vector.broadcast %59 : vector<1x128xf32> to vector<2x128xf32>
    %61 = vector.extract_strided_slice %58 {offsets = [0, 0], sizes = [2, 96], strides = [1, 1]} : vector<2x128xf32> to vector<2x96xf32>
    %62 = arith.negf %61 : vector<2x96xf32>
    %63 = math.exp %62 : vector<2x96xf32>
    %cst_31 = arith.constant 1.000000e+00 : f32
    %64 = vector.broadcast %cst_31 : f32 to vector<2x96xf32>
    %65 = arith.addf %64, %63 : vector<2x96xf32>
    %66 = arith.divf %64, %65 : vector<2x96xf32>
    %67 = vector.extract_strided_slice %58 {offsets = [0, 96], sizes = [2, 32], strides = [1, 1]} : vector<2x128xf32> to vector<2x32xf32>
    %68 = math.tanh %67 : vector<2x32xf32>
    %69 = vector.extract_strided_slice %66 {offsets = [0, 0], sizes = [2, 32], strides = [1, 1]} : vector<2x96xf32> to vector<2x32xf32>
    %70 = vector.extract_strided_slice %66 {offsets = [0, 32], sizes = [2, 32], strides = [1, 1]} : vector<2x96xf32> to vector<2x32xf32>
    %71 = vector.extract_strided_slice %66 {offsets = [0, 64], sizes = [2, 32], strides = [1, 1]} : vector<2x96xf32> to vector<2x32xf32>
    %72 = arith.mulf %70, %55 : vector<2x32xf32>
    %73 = arith.mulf %69, %68 : vector<2x32xf32>
    %74 = arith.addf %72, %73 : vector<2x32xf32>
    %75 = math.tanh %74 : vector<2x32xf32>
    %76 = arith.mulf %71, %75 : vector<2x32xf32>
    %77 = vector.extract_strided_slice %60 {offsets = [0, 0], sizes = [2, 96], strides = [1, 1]} : vector<2x128xf32> to vector<2x96xf32>
    %78 = arith.negf %77 : vector<2x96xf32>
    %79 = math.exp %78 : vector<2x96xf32>
    %cst_32 = arith.constant 1.000000e+00 : f32
    %80 = vector.broadcast %cst_32 : f32 to vector<2x96xf32>
    %81 = arith.addf %80, %79 : vector<2x96xf32>
    %82 = arith.divf %80, %81 : vector<2x96xf32>
    %83 = vector.extract_strided_slice %60 {offsets = [0, 96], sizes = [2, 32], strides = [1, 1]} : vector<2x128xf32> to vector<2x32xf32>
    %84 = math.tanh %83 : vector<2x32xf32>
    %85 = vector.extract_strided_slice %82 {offsets = [0, 0], sizes = [2, 32], strides = [1, 1]} : vector<2x96xf32> to vector<2x32xf32>
    %86 = vector.extract_strided_slice %82 {offsets = [0, 32], sizes = [2, 32], strides = [1, 1]} : vector<2x96xf32> to vector<2x32xf32>
    %87 = vector.extract_strided_slice %82 {offsets = [0, 64], sizes = [2, 32], strides = [1, 1]} : vector<2x96xf32> to vector<2x32xf32>
    %88 = arith.mulf %86, %56 : vector<2x32xf32>
    %89 = arith.mulf %85, %84 : vector<2x32xf32>
    %90 = arith.addf %88, %89 : vector<2x32xf32>
    %91 = math.tanh %90 : vector<2x32xf32>
    %92 = arith.mulf %87, %91 : vector<2x32xf32>
    %c0_33 = arith.constant 0 : index
    %c0_34 = arith.constant 0 : index
    %c0_35 = arith.constant 0 : index
    %93 = vector.load %arg17[%c0_33, %c0_34, %c0_35] : memref<2x8x64xf32, #tpu.memory_space<vmem>>, vector<2x1x32xf32>
    %94 = vector.shape_cast %93 : vector<2x1x32xf32> to vector<2x32xf32>
    %95 = vector.shape_cast %76 : vector<2x32xf32> to vector<2x1x32xf32>
    tpu.vector_store %arg17[%c0_33, %c0_34, %c0_35], %95 {strides = array<i32>} : memref<2x8x64xf32, #tpu.memory_space<vmem>>, vector<2x1x32xf32>,
    %c0_36 = arith.constant 0 : index
    %c7 = arith.constant 7 : index
    %c32 = arith.constant 32 : index
    %96 = vector.load %arg17[%c0_36, %c7, %c32] : memref<2x8x64xf32, #tpu.memory_space<vmem>>, vector<2x1x32xf32>
    %97 = vector.shape_cast %96 : vector<2x1x32xf32> to vector<2x32xf32>
    %98 = vector.shape_cast %92 : vector<2x32xf32> to vector<2x1x32xf32>
    tpu.vector_store %arg17[%c0_36, %c7, %c32], %98 {strides = array<i32>} : memref<2x8x64xf32, #tpu.memory_space<vmem>>, vector<2x1x32xf32>,
    %99 = tpu.concatenate %76, %92 in 1 : vector<2x32xf32>, vector<2x32xf32> -> vector<2x64xf32>
    %cst_37 = arith.constant dense<0.000000e+00> : vector<2x256xf32>
    %100 = tpu.matmul %99, %52, %cst_37 {dimension_numbers = #tpu.dot_dimension_numbers<[1], [0], [0], [1], [0, 0, 1, 1], [], []>} : vector<2x64xf32>, vector<64x256xf32>, vector<2x256xf32> -> vector<2x256xf32>
    %101 = vector.extract_strided_slice %100 {offsets = [0, 0], sizes = [2, 128], strides = [1, 1]} : vector<2x256xf32> to vector<2x128xf32>
    %102 = vector.extract_strided_slice %51 {offsets = [0, 0, 0], sizes = [2, 1, 128], strides = [1, 1, 1]} : vector<2x8x256xf32> to vector<2x1x128xf32>
    %103 = vector.shape_cast %102 : vector<2x1x128xf32> to vector<2x128xf32>
    %104 = arith.addf %101, %103 : vector<2x128xf32>
    %105 = vector.broadcast %53 : vector<1x128xf32> to vector<2x128xf32>
    %106 = arith.addf %104, %105 : vector<2x128xf32>
    %107 = vector.extract_strided_slice %100 {offsets = [0, 128], sizes = [2, 128], strides = [1, 1]} : vector<2x256xf32> to vector<2x128xf32>
    %108 = vector.extract_strided_slice %51 {offsets = [0, 7, 128], sizes = [2, 1, 128], strides = [1, 1, 1]} : vector<2x8x256xf32> to vector<2x1x128xf32>
    %109 = vector.shape_cast %108 : vector<2x1x128xf32> to vector<2x128xf32>
    %110 = arith.addf %107, %109 : vector<2x128xf32>
    %111 = vector.broadcast %54 : vector<1x128xf32> to vector<2x128xf32>
    %112 = arith.addf %110, %111 : vector<2x128xf32>
    %113 = vector.extract_strided_slice %106 {offsets = [0, 0], sizes = [2, 96], strides = [1, 1]} : vector<2x128xf32> to vector<2x96xf32>
    %114 = arith.negf %113 : vector<2x96xf32>
    %115 = math.exp %114 : vector<2x96xf32>
    %cst_38 = arith.constant 1.000000e+00 : f32
    %116 = vector.broadcast %cst_38 : f32 to vector<2x96xf32>
    %117 = arith.addf %116, %115 : vector<2x96xf32>
    %118 = arith.divf %116, %117 : vector<2x96xf32>
    %119 = vector.extract_strided_slice %106 {offsets = [0, 96], sizes = [2, 32], strides = [1, 1]} : vector<2x128xf32> to vector<2x32xf32>
    %120 = math.tanh %119 : vector<2x32xf32>
    %121 = vector.extract_strided_slice %118 {offsets = [0, 0], sizes = [2, 32], strides = [1, 1]} : vector<2x96xf32> to vector<2x32xf32>
    %122 = vector.extract_strided_slice %118 {offsets = [0, 32], sizes = [2, 32], strides = [1, 1]} : vector<2x96xf32> to vector<2x32xf32>
    %123 = vector.extract_strided_slice %118 {offsets = [0, 64], sizes = [2, 32], strides = [1, 1]} : vector<2x96xf32> to vector<2x32xf32>
    %124 = arith.mulf %122, %74 : vector<2x32xf32>
    %125 = arith.mulf %121, %120 : vector<2x32xf32>
    %126 = arith.addf %124, %125 : vector<2x32xf32>
    %127 = math.tanh %126 : vector<2x32xf32>
    %128 = arith.mulf %123, %127 : vector<2x32xf32>
    %129 = vector.extract_strided_slice %112 {offsets = [0, 0], sizes = [2, 96], strides = [1, 1]} : vector<2x128xf32> to vector<2x96xf32>
    %130 = arith.negf %129 : vector<2x96xf32>
    %131 = math.exp %130 : vector<2x96xf32>
    %cst_39 = arith.constant 1.000000e+00 : f32
    %132 = vector.broadcast %cst_39 : f32 to vector<2x96xf32>
    %133 = arith.addf %132, %131 : vector<2x96xf32>
    %134 = arith.divf %132, %133 : vector<2x96xf32>
    %135 = vector.extract_strided_slice %112 {offsets = [0, 96], sizes = [2, 32], strides = [1, 1]} : vector<2x128xf32> to vector<2x32xf32>
    %136 = math.tanh %135 : vector<2x32xf32>
    %137 = vector.extract_strided_slice %134 {offsets = [0, 0], sizes = [2, 32], strides = [1, 1]} : vector<2x96xf32> to vector<2x32xf32>
    %138 = vector.extract_strided_slice %134 {offsets = [0, 32], sizes = [2, 32], strides = [1, 1]} : vector<2x96xf32> to vector<2x32xf32>
    %139 = vector.extract_strided_slice %134 {offsets = [0, 64], sizes = [2, 32], strides = [1, 1]} : vector<2x96xf32> to vector<2x32xf32>
    %140 = arith.mulf %138, %90 : vector<2x32xf32>
    %141 = arith.mulf %137, %136 : vector<2x32xf32>
    %142 = arith.addf %140, %141 : vector<2x32xf32>
    %143 = math.tanh %142 : vector<2x32xf32>
    %144 = arith.mulf %139, %143 : vector<2x32xf32>
    %c0_40 = arith.constant 0 : index
    %c1_41 = arith.constant 1 : index
    %c0_42 = arith.constant 0 : index
    %145 = vector.load %arg17[%c0_40, %c1_41, %c0_42] : memref<2x8x64xf32, #tpu.memory_space<vmem>>, vector<2x1x32xf32>
    %146 = vector.shape_cast %145 : vector<2x1x32xf32> to vector<2x32xf32>
    %147 = vector.shape_cast %128 : vector<2x32xf32> to vector<2x1x32xf32>
    tpu.vector_store %arg17[%c0_40, %c1_41, %c0_42], %147 {strides = array<i32>} : memref<2x8x64xf32, #tpu.memory_space<vmem>>, vector<2x1x32xf32>,
    %c0_43 = arith.constant 0 : index
    %c6 = arith.constant 6 : index
    %c32_44 = arith.constant 32 : index
    %148 = vector.load %arg17[%c0_43, %c6, %c32_44] : memref<2x8x64xf32, #tpu.memory_space<vmem>>, vector<2x1x32xf32>
    %149 = vector.shape_cast %148 : vector<2x1x32xf32> to vector<2x32xf32>
    %150 = vector.shape_cast %144 : vector<2x32xf32> to vector<2x1x32xf32>
    tpu.vector_store %arg17[%c0_43, %c6, %c32_44], %150 {strides = array<i32>} : memref<2x8x64xf32, #tpu.memory_space<vmem>>, vector<2x1x32xf32>,
    %151 = tpu.concatenate %128, %144 in 1 : vector<2x32xf32>, vector<2x32xf32> -> vector<2x64xf32>
    %cst_45 = arith.constant dense<0.000000e+00> : vector<2x256xf32>
    %152 = tpu.matmul %151, %52, %cst_45 {dimension_numbers = #tpu.dot_dimension_numbers<[1], [0], [0], [1], [0, 0, 1, 1], [], []>} : vector<2x64xf32>, vector<64x256xf32>, vector<2x256xf32> -> vector<2x256xf32>
    %153 = vector.extract_strided_slice %152 {offsets = [0, 0], sizes = [2, 128], strides = [1, 1]} : vector<2x256xf32> to vector<2x128xf32>
    %154 = vector.extract_strided_slice %51 {offsets = [0, 1, 0], sizes = [2, 1, 128], strides = [1, 1, 1]} : vector<2x8x256xf32> to vector<2x1x128xf32>
    %155 = vector.shape_cast %154 : vector<2x1x128xf32> to vector<2x128xf32>
    %156 = arith.addf %153, %155 : vector<2x128xf32>
    %157 = vector.broadcast %53 : vector<1x128xf32> to vector<2x128xf32>
    %158 = arith.addf %156, %157 : vector<2x128xf32>
    %159 = vector.extract_strided_slice %152 {offsets = [0, 128], sizes = [2, 128], strides = [1, 1]} : vector<2x256xf32> to vector<2x128xf32>
    %160 = vector.extract_strided_slice %51 {offsets = [0, 6, 128], sizes = [2, 1, 128], strides = [1, 1, 1]} : vector<2x8x256xf32> to vector<2x1x128xf32>
    %161 = vector.shape_cast %160 : vector<2x1x128xf32> to vector<2x128xf32>
    %162 = arith.addf %159, %161 : vector<2x128xf32>
    %163 = vector.broadcast %54 : vector<1x128xf32> to vector<2x128xf32>
    %164 = arith.addf %162, %163 : vector<2x128xf32>
    %165 = vector.extract_strided_slice %158 {offsets = [0, 0], sizes = [2, 96], strides = [1, 1]} : vector<2x128xf32> to vector<2x96xf32>
    %166 = arith.negf %165 : vector<2x96xf32>
    %167 = math.exp %166 : vector<2x96xf32>
    %cst_46 = arith.constant 1.000000e+00 : f32
    %168 = vector.broadcast %cst_46 : f32 to vector<2x96xf32>
    %169 = arith.addf %168, %167 : vector<2x96xf32>
    %170 = arith.divf %168, %169 : vector<2x96xf32>
    %171 = vector.extract_strided_slice %158 {offsets = [0, 96], sizes = [2, 32], strides = [1, 1]} : vector<2x128xf32> to vector<2x32xf32>
    %172 = math.tanh %171 : vector<2x32xf32>
    %173 = vector.extract_strided_slice %170 {offsets = [0, 0], sizes = [2, 32], strides = [1, 1]} : vector<2x96xf32> to vector<2x32xf32>
    %174 = vector.extract_strided_slice %170 {offsets = [0, 32], sizes = [2, 32], strides = [1, 1]} : vector<2x96xf32> to vector<2x32xf32>
    %175 = vector.extract_strided_slice %170 {offsets = [0, 64], sizes = [2, 32], strides = [1, 1]} : vector<2x96xf32> to vector<2x32xf32>
    %176 = arith.mulf %174, %126 : vector<2x32xf32>
    %177 = arith.mulf %173, %172 : vector<2x32xf32>
    %178 = arith.addf %176, %177 : vector<2x32xf32>
    %179 = math.tanh %178 : vector<2x32xf32>
    %180 = arith.mulf %175, %179 : vector<2x32xf32>
    %181 = vector.extract_strided_slice %164 {offsets = [0, 0], sizes = [2, 96], strides = [1, 1]} : vector<2x128xf32> to vector<2x96xf32>
    %182 = arith.negf %181 : vector<2x96xf32>
    %183 = math.exp %182 : vector<2x96xf32>
    %cst_47 = arith.constant 1.000000e+00 : f32
    %184 = vector.broadcast %cst_47 : f32 to vector<2x96xf32>
    %185 = arith.addf %184, %183 : vector<2x96xf32>
    %186 = arith.divf %184, %185 : vector<2x96xf32>
    %187 = vector.extract_strided_slice %164 {offsets = [0, 96], sizes = [2, 32], strides = [1, 1]} : vector<2x128xf32> to vector<2x32xf32>
    %188 = math.tanh %187 : vector<2x32xf32>
    %189 = vector.extract_strided_slice %186 {offsets = [0, 0], sizes = [2, 32], strides = [1, 1]} : vector<2x96xf32> to vector<2x32xf32>
    %190 = vector.extract_strided_slice %186 {offsets = [0, 32], sizes = [2, 32], strides = [1, 1]} : vector<2x96xf32> to vector<2x32xf32>
    %191 = vector.extract_strided_slice %186 {offsets = [0, 64], sizes = [2, 32], strides = [1, 1]} : vector<2x96xf32> to vector<2x32xf32>
    %192 = arith.mulf %190, %142 : vector<2x32xf32>
    %193 = arith.mulf %189, %188 : vector<2x32xf32>
    %194 = arith.addf %192, %193 : vector<2x32xf32>
    %195 = math.tanh %194 : vector<2x32xf32>
    %196 = arith.mulf %191, %195 : vector<2x32xf32>
    %c0_48 = arith.constant 0 : index
    %c2 = arith.constant 2 : index
    %c0_49 = arith.constant 0 : index
    %197 = vector.load %arg17[%c0_48, %c2, %c0_49] : memref<2x8x64xf32, #tpu.memory_space<vmem>>, vector<2x1x32xf32>
    %198 = vector.shape_cast %197 : vector<2x1x32xf32> to vector<2x32xf32>
    %199 = vector.shape_cast %180 : vector<2x32xf32> to vector<2x1x32xf32>
    tpu.vector_store %arg17[%c0_48, %c2, %c0_49], %199 {strides = array<i32>} : memref<2x8x64xf32, #tpu.memory_space<vmem>>, vector<2x1x32xf32>,
    %c0_50 = arith.constant 0 : index
    %c5 = arith.constant 5 : index
    %c32_51 = arith.constant 32 : index
    %200 = vector.load %arg17[%c0_50, %c5, %c32_51] : memref<2x8x64xf32, #tpu.memory_space<vmem>>, vector<2x1x32xf32>
    %201 = vector.shape_cast %200 : vector<2x1x32xf32> to vector<2x32xf32>
    %202 = vector.shape_cast %196 : vector<2x32xf32> to vector<2x1x32xf32>
    tpu.vector_store %arg17[%c0_50, %c5, %c32_51], %202 {strides = array<i32>} : memref<2x8x64xf32, #tpu.memory_space<vmem>>, vector<2x1x32xf32>,
    %203 = tpu.concatenate %180, %196 in 1 : vector<2x32xf32>, vector<2x32xf32> -> vector<2x64xf32>
    %cst_52 = arith.constant dense<0.000000e+00> : vector<2x256xf32>
    %204 = tpu.matmul %203, %52, %cst_52 {dimension_numbers = #tpu.dot_dimension_numbers<[1], [0], [0], [1], [0, 0, 1, 1], [], []>} : vector<2x64xf32>, vector<64x256xf32>, vector<2x256xf32> -> vector<2x256xf32>
    %205 = vector.extract_strided_slice %204 {offsets = [0, 0], sizes = [2, 128], strides = [1, 1]} : vector<2x256xf32> to vector<2x128xf32>
    %206 = vector.extract_strided_slice %51 {offsets = [0, 2, 0], sizes = [2, 1, 128], strides = [1, 1, 1]} : vector<2x8x256xf32> to vector<2x1x128xf32>
    %207 = vector.shape_cast %206 : vector<2x1x128xf32> to vector<2x128xf32>
    %208 = arith.addf %205, %207 : vector<2x128xf32>
    %209 = vector.broadcast %53 : vector<1x128xf32> to vector<2x128xf32>
    %210 = arith.addf %208, %209 : vector<2x128xf32>
    %211 = vector.extract_strided_slice %204 {offsets = [0, 128], sizes = [2, 128], strides = [1, 1]} : vector<2x256xf32> to vector<2x128xf32>
    %212 = vector.extract_strided_slice %51 {offsets = [0, 5, 128], sizes = [2, 1, 128], strides = [1, 1, 1]} : vector<2x8x256xf32> to vector<2x1x128xf32>
    %213 = vector.shape_cast %212 : vector<2x1x128xf32> to vector<2x128xf32>
    %214 = arith.addf %211, %213 : vector<2x128xf32>
    %215 = vector.broadcast %54 : vector<1x128xf32> to vector<2x128xf32>
    %216 = arith.addf %214, %215 : vector<2x128xf32>
    %217 = vector.extract_strided_slice %210 {offsets = [0, 0], sizes = [2, 96], strides = [1, 1]} : vector<2x128xf32> to vector<2x96xf32>
    %218 = arith.negf %217 : vector<2x96xf32>
    %219 = math.exp %218 : vector<2x96xf32>
    %cst_53 = arith.constant 1.000000e+00 : f32
    %220 = vector.broadcast %cst_53 : f32 to vector<2x96xf32>
    %221 = arith.addf %220, %219 : vector<2x96xf32>
    %222 = arith.divf %220, %221 : vector<2x96xf32>
    %223 = vector.extract_strided_slice %210 {offsets = [0, 96], sizes = [2, 32], strides = [1, 1]} : vector<2x128xf32> to vector<2x32xf32>
    %224 = math.tanh %223 : vector<2x32xf32>
    %225 = vector.extract_strided_slice %222 {offsets = [0, 0], sizes = [2, 32], strides = [1, 1]} : vector<2x96xf32> to vector<2x32xf32>
    %226 = vector.extract_strided_slice %222 {offsets = [0, 32], sizes = [2, 32], strides = [1, 1]} : vector<2x96xf32> to vector<2x32xf32>
    %227 = vector.extract_strided_slice %222 {offsets = [0, 64], sizes = [2, 32], strides = [1, 1]} : vector<2x96xf32> to vector<2x32xf32>
    %228 = arith.mulf %226, %178 : vector<2x32xf32>
    %229 = arith.mulf %225, %224 : vector<2x32xf32>
    %230 = arith.addf %228, %229 : vector<2x32xf32>
    %231 = math.tanh %230 : vector<2x32xf32>
    %232 = arith.mulf %227, %231 : vector<2x32xf32>
    %233 = vector.extract_strided_slice %216 {offsets = [0, 0], sizes = [2, 96], strides = [1, 1]} : vector<2x128xf32> to vector<2x96xf32>
    %234 = arith.negf %233 : vector<2x96xf32>
    %235 = math.exp %234 : vector<2x96xf32>
    %cst_54 = arith.constant 1.000000e+00 : f32
    %236 = vector.broadcast %cst_54 : f32 to vector<2x96xf32>
    %237 = arith.addf %236, %235 : vector<2x96xf32>
    %238 = arith.divf %236, %237 : vector<2x96xf32>
    %239 = vector.extract_strided_slice %216 {offsets = [0, 96], sizes = [2, 32], strides = [1, 1]} : vector<2x128xf32> to vector<2x32xf32>
    %240 = math.tanh %239 : vector<2x32xf32>
    %241 = vector.extract_strided_slice %238 {offsets = [0, 0], sizes = [2, 32], strides = [1, 1]} : vector<2x96xf32> to vector<2x32xf32>
    %242 = vector.extract_strided_slice %238 {offsets = [0, 32], sizes = [2, 32], strides = [1, 1]} : vector<2x96xf32> to vector<2x32xf32>
    %243 = vector.extract_strided_slice %238 {offsets = [0, 64], sizes = [2, 32], strides = [1, 1]} : vector<2x96xf32> to vector<2x32xf32>
    %244 = arith.mulf %242, %194 : vector<2x32xf32>
    %245 = arith.mulf %241, %240 : vector<2x32xf32>
    %246 = arith.addf %244, %245 : vector<2x32xf32>
    %247 = math.tanh %246 : vector<2x32xf32>
    %248 = arith.mulf %243, %247 : vector<2x32xf32>
    %c0_55 = arith.constant 0 : index
    %c3 = arith.constant 3 : index
    %c0_56 = arith.constant 0 : index
    %249 = vector.load %arg17[%c0_55, %c3, %c0_56] : memref<2x8x64xf32, #tpu.memory_space<vmem>>, vector<2x1x32xf32>
    %250 = vector.shape_cast %249 : vector<2x1x32xf32> to vector<2x32xf32>
    %251 = vector.shape_cast %232 : vector<2x32xf32> to vector<2x1x32xf32>
    tpu.vector_store %arg17[%c0_55, %c3, %c0_56], %251 {strides = array<i32>} : memref<2x8x64xf32, #tpu.memory_space<vmem>>, vector<2x1x32xf32>,
    %c0_57 = arith.constant 0 : index
    %c4 = arith.constant 4 : index
    %c32_58 = arith.constant 32 : index
    %252 = vector.load %arg17[%c0_57, %c4, %c32_58] : memref<2x8x64xf32, #tpu.memory_space<vmem>>, vector<2x1x32xf32>
    %253 = vector.shape_cast %252 : vector<2x1x32xf32> to vector<2x32xf32>
    %254 = vector.shape_cast %248 : vector<2x32xf32> to vector<2x1x32xf32>
    tpu.vector_store %arg17[%c0_57, %c4, %c32_58], %254 {strides = array<i32>} : memref<2x8x64xf32, #tpu.memory_space<vmem>>, vector<2x1x32xf32>,
    %255 = tpu.concatenate %232, %248 in 1 : vector<2x32xf32>, vector<2x32xf32> -> vector<2x64xf32>
    %cst_59 = arith.constant dense<0.000000e+00> : vector<2x256xf32>
    %256 = tpu.matmul %255, %52, %cst_59 {dimension_numbers = #tpu.dot_dimension_numbers<[1], [0], [0], [1], [0, 0, 1, 1], [], []>} : vector<2x64xf32>, vector<64x256xf32>, vector<2x256xf32> -> vector<2x256xf32>
    %257 = vector.extract_strided_slice %256 {offsets = [0, 0], sizes = [2, 128], strides = [1, 1]} : vector<2x256xf32> to vector<2x128xf32>
    %258 = vector.extract_strided_slice %51 {offsets = [0, 3, 0], sizes = [2, 1, 128], strides = [1, 1, 1]} : vector<2x8x256xf32> to vector<2x1x128xf32>
    %259 = vector.shape_cast %258 : vector<2x1x128xf32> to vector<2x128xf32>
    %260 = arith.addf %257, %259 : vector<2x128xf32>
    %261 = vector.broadcast %53 : vector<1x128xf32> to vector<2x128xf32>
    %262 = arith.addf %260, %261 : vector<2x128xf32>
    %263 = vector.extract_strided_slice %256 {offsets = [0, 128], sizes = [2, 128], strides = [1, 1]} : vector<2x256xf32> to vector<2x128xf32>
    %264 = vector.extract_strided_slice %51 {offsets = [0, 4, 128], sizes = [2, 1, 128], strides = [1, 1, 1]} : vector<2x8x256xf32> to vector<2x1x128xf32>
    %265 = vector.shape_cast %264 : vector<2x1x128xf32> to vector<2x128xf32>
    %266 = arith.addf %263, %265 : vector<2x128xf32>
    %267 = vector.broadcast %54 : vector<1x128xf32> to vector<2x128xf32>
    %268 = arith.addf %266, %267 : vector<2x128xf32>
    %269 = vector.extract_strided_slice %262 {offsets = [0, 0], sizes = [2, 96], strides = [1, 1]} : vector<2x128xf32> to vector<2x96xf32>
    %270 = arith.negf %269 : vector<2x96xf32>
    %271 = math.exp %270 : vector<2x96xf32>
    %cst_60 = arith.constant 1.000000e+00 : f32
    %272 = vector.broadcast %cst_60 : f32 to vector<2x96xf32>
    %273 = arith.addf %272, %271 : vector<2x96xf32>
    %274 = arith.divf %272, %273 : vector<2x96xf32>
    %275 = vector.extract_strided_slice %262 {offsets = [0, 96], sizes = [2, 32], strides = [1, 1]} : vector<2x128xf32> to vector<2x32xf32>
    %276 = math.tanh %275 : vector<2x32xf32>
    %277 = vector.extract_strided_slice %274 {offsets = [0, 0], sizes = [2, 32], strides = [1, 1]} : vector<2x96xf32> to vector<2x32xf32>
    %278 = vector.extract_strided_slice %274 {offsets = [0, 32], sizes = [2, 32], strides = [1, 1]} : vector<2x96xf32> to vector<2x32xf32>
    %279 = vector.extract_strided_slice %274 {offsets = [0, 64], sizes = [2, 32], strides = [1, 1]} : vector<2x96xf32> to vector<2x32xf32>
    %280 = arith.mulf %278, %230 : vector<2x32xf32>
    %281 = arith.mulf %277, %276 : vector<2x32xf32>
    %282 = arith.addf %280, %281 : vector<2x32xf32>
    %283 = math.tanh %282 : vector<2x32xf32>
    %284 = arith.mulf %279, %283 : vector<2x32xf32>
    %285 = vector.extract_strided_slice %268 {offsets = [0, 0], sizes = [2, 96], strides = [1, 1]} : vector<2x128xf32> to vector<2x96xf32>
    %286 = arith.negf %285 : vector<2x96xf32>
    %287 = math.exp %286 : vector<2x96xf32>
    %cst_61 = arith.constant 1.000000e+00 : f32
    %288 = vector.broadcast %cst_61 : f32 to vector<2x96xf32>
    %289 = arith.addf %288, %287 : vector<2x96xf32>
    %290 = arith.divf %288, %289 : vector<2x96xf32>
    %291 = vector.extract_strided_slice %268 {offsets = [0, 96], sizes = [2, 32], strides = [1, 1]} : vector<2x128xf32> to vector<2x32xf32>
    %292 = math.tanh %291 : vector<2x32xf32>
    %293 = vector.extract_strided_slice %290 {offsets = [0, 0], sizes = [2, 32], strides = [1, 1]} : vector<2x96xf32> to vector<2x32xf32>
    %294 = vector.extract_strided_slice %290 {offsets = [0, 32], sizes = [2, 32], strides = [1, 1]} : vector<2x96xf32> to vector<2x32xf32>
    %295 = vector.extract_strided_slice %290 {offsets = [0, 64], sizes = [2, 32], strides = [1, 1]} : vector<2x96xf32> to vector<2x32xf32>
    %296 = arith.mulf %294, %246 : vector<2x32xf32>
    %297 = arith.mulf %293, %292 : vector<2x32xf32>
    %298 = arith.addf %296, %297 : vector<2x32xf32>
    %299 = math.tanh %298 : vector<2x32xf32>
    %300 = arith.mulf %295, %299 : vector<2x32xf32>
    %c0_62 = arith.constant 0 : index
    %c4_63 = arith.constant 4 : index
    %c0_64 = arith.constant 0 : index
    %301 = vector.load %arg17[%c0_62, %c4_63, %c0_64] : memref<2x8x64xf32, #tpu.memory_space<vmem>>, vector<2x1x32xf32>
    %302 = vector.shape_cast %301 : vector<2x1x32xf32> to vector<2x32xf32>
    %303 = vector.shape_cast %284 : vector<2x32xf32> to vector<2x1x32xf32>
    tpu.vector_store %arg17[%c0_62, %c4_63, %c0_64], %303 {strides = array<i32>} : memref<2x8x64xf32, #tpu.memory_space<vmem>>, vector<2x1x32xf32>,
    %c0_65 = arith.constant 0 : index
    %c3_66 = arith.constant 3 : index
    %c32_67 = arith.constant 32 : index
    %304 = vector.load %arg17[%c0_65, %c3_66, %c32_67] : memref<2x8x64xf32, #tpu.memory_space<vmem>>, vector<2x1x32xf32>
    %305 = vector.shape_cast %304 : vector<2x1x32xf32> to vector<2x32xf32>
    %306 = vector.shape_cast %300 : vector<2x32xf32> to vector<2x1x32xf32>
    tpu.vector_store %arg17[%c0_65, %c3_66, %c32_67], %306 {strides = array<i32>} : memref<2x8x64xf32, #tpu.memory_space<vmem>>, vector<2x1x32xf32>,
    %307 = tpu.concatenate %284, %300 in 1 : vector<2x32xf32>, vector<2x32xf32> -> vector<2x64xf32>
    %cst_68 = arith.constant dense<0.000000e+00> : vector<2x256xf32>
    %308 = tpu.matmul %307, %52, %cst_68 {dimension_numbers = #tpu.dot_dimension_numbers<[1], [0], [0], [1], [0, 0, 1, 1], [], []>} : vector<2x64xf32>, vector<64x256xf32>, vector<2x256xf32> -> vector<2x256xf32>
    %309 = vector.extract_strided_slice %308 {offsets = [0, 0], sizes = [2, 128], strides = [1, 1]} : vector<2x256xf32> to vector<2x128xf32>
    %310 = vector.extract_strided_slice %51 {offsets = [0, 4, 0], sizes = [2, 1, 128], strides = [1, 1, 1]} : vector<2x8x256xf32> to vector<2x1x128xf32>
    %311 = vector.shape_cast %310 : vector<2x1x128xf32> to vector<2x128xf32>
    %312 = arith.addf %309, %311 : vector<2x128xf32>
    %313 = vector.broadcast %53 : vector<1x128xf32> to vector<2x128xf32>
    %314 = arith.addf %312, %313 : vector<2x128xf32>
    %315 = vector.extract_strided_slice %308 {offsets = [0, 128], sizes = [2, 128], strides = [1, 1]} : vector<2x256xf32> to vector<2x128xf32>
    %316 = vector.extract_strided_slice %51 {offsets = [0, 3, 128], sizes = [2, 1, 128], strides = [1, 1, 1]} : vector<2x8x256xf32> to vector<2x1x128xf32>
    %317 = vector.shape_cast %316 : vector<2x1x128xf32> to vector<2x128xf32>
    %318 = arith.addf %315, %317 : vector<2x128xf32>
    %319 = vector.broadcast %54 : vector<1x128xf32> to vector<2x128xf32>
    %320 = arith.addf %318, %319 : vector<2x128xf32>
    %321 = vector.extract_strided_slice %314 {offsets = [0, 0], sizes = [2, 96], strides = [1, 1]} : vector<2x128xf32> to vector<2x96xf32>
    %322 = arith.negf %321 : vector<2x96xf32>
    %323 = math.exp %322 : vector<2x96xf32>
    %cst_69 = arith.constant 1.000000e+00 : f32
    %324 = vector.broadcast %cst_69 : f32 to vector<2x96xf32>
    %325 = arith.addf %324, %323 : vector<2x96xf32>
    %326 = arith.divf %324, %325 : vector<2x96xf32>
    %327 = vector.extract_strided_slice %314 {offsets = [0, 96], sizes = [2, 32], strides = [1, 1]} : vector<2x128xf32> to vector<2x32xf32>
    %328 = math.tanh %327 : vector<2x32xf32>
    %329 = vector.extract_strided_slice %326 {offsets = [0, 0], sizes = [2, 32], strides = [1, 1]} : vector<2x96xf32> to vector<2x32xf32>
    %330 = vector.extract_strided_slice %326 {offsets = [0, 32], sizes = [2, 32], strides = [1, 1]} : vector<2x96xf32> to vector<2x32xf32>
    %331 = vector.extract_strided_slice %326 {offsets = [0, 64], sizes = [2, 32], strides = [1, 1]} : vector<2x96xf32> to vector<2x32xf32>
    %332 = arith.mulf %330, %282 : vector<2x32xf32>
    %333 = arith.mulf %329, %328 : vector<2x32xf32>
    %334 = arith.addf %332, %333 : vector<2x32xf32>
    %335 = math.tanh %334 : vector<2x32xf32>
    %336 = arith.mulf %331, %335 : vector<2x32xf32>
    %337 = vector.extract_strided_slice %320 {offsets = [0, 0], sizes = [2, 96], strides = [1, 1]} : vector<2x128xf32> to vector<2x96xf32>
    %338 = arith.negf %337 : vector<2x96xf32>
    %339 = math.exp %338 : vector<2x96xf32>
    %cst_70 = arith.constant 1.000000e+00 : f32
    %340 = vector.broadcast %cst_70 : f32 to vector<2x96xf32>
    %341 = arith.addf %340, %339 : vector<2x96xf32>
    %342 = arith.divf %340, %341 : vector<2x96xf32>
    %343 = vector.extract_strided_slice %320 {offsets = [0, 96], sizes = [2, 32], strides = [1, 1]} : vector<2x128xf32> to vector<2x32xf32>
    %344 = math.tanh %343 : vector<2x32xf32>
    %345 = vector.extract_strided_slice %342 {offsets = [0, 0], sizes = [2, 32], strides = [1, 1]} : vector<2x96xf32> to vector<2x32xf32>
    %346 = vector.extract_strided_slice %342 {offsets = [0, 32], sizes = [2, 32], strides = [1, 1]} : vector<2x96xf32> to vector<2x32xf32>
    %347 = vector.extract_strided_slice %342 {offsets = [0, 64], sizes = [2, 32], strides = [1, 1]} : vector<2x96xf32> to vector<2x32xf32>
    %348 = arith.mulf %346, %298 : vector<2x32xf32>
    %349 = arith.mulf %345, %344 : vector<2x32xf32>
    %350 = arith.addf %348, %349 : vector<2x32xf32>
    %351 = math.tanh %350 : vector<2x32xf32>
    %352 = arith.mulf %347, %351 : vector<2x32xf32>
    %c0_71 = arith.constant 0 : index
    %c5_72 = arith.constant 5 : index
    %c0_73 = arith.constant 0 : index
    %353 = vector.load %arg17[%c0_71, %c5_72, %c0_73] : memref<2x8x64xf32, #tpu.memory_space<vmem>>, vector<2x1x32xf32>
    %354 = vector.shape_cast %353 : vector<2x1x32xf32> to vector<2x32xf32>
    %355 = vector.shape_cast %336 : vector<2x32xf32> to vector<2x1x32xf32>
    tpu.vector_store %arg17[%c0_71, %c5_72, %c0_73], %355 {strides = array<i32>} : memref<2x8x64xf32, #tpu.memory_space<vmem>>, vector<2x1x32xf32>,
    %c0_74 = arith.constant 0 : index
    %c2_75 = arith.constant 2 : index
    %c32_76 = arith.constant 32 : index
    %356 = vector.load %arg17[%c0_74, %c2_75, %c32_76] : memref<2x8x64xf32, #tpu.memory_space<vmem>>, vector<2x1x32xf32>
    %357 = vector.shape_cast %356 : vector<2x1x32xf32> to vector<2x32xf32>
    %358 = vector.shape_cast %352 : vector<2x32xf32> to vector<2x1x32xf32>
    tpu.vector_store %arg17[%c0_74, %c2_75, %c32_76], %358 {strides = array<i32>} : memref<2x8x64xf32, #tpu.memory_space<vmem>>, vector<2x1x32xf32>,
    %359 = tpu.concatenate %336, %352 in 1 : vector<2x32xf32>, vector<2x32xf32> -> vector<2x64xf32>
    %cst_77 = arith.constant dense<0.000000e+00> : vector<2x256xf32>
    %360 = tpu.matmul %359, %52, %cst_77 {dimension_numbers = #tpu.dot_dimension_numbers<[1], [0], [0], [1], [0, 0, 1, 1], [], []>} : vector<2x64xf32>, vector<64x256xf32>, vector<2x256xf32> -> vector<2x256xf32>
    %361 = vector.extract_strided_slice %360 {offsets = [0, 0], sizes = [2, 128], strides = [1, 1]} : vector<2x256xf32> to vector<2x128xf32>
    %362 = vector.extract_strided_slice %51 {offsets = [0, 5, 0], sizes = [2, 1, 128], strides = [1, 1, 1]} : vector<2x8x256xf32> to vector<2x1x128xf32>
    %363 = vector.shape_cast %362 : vector<2x1x128xf32> to vector<2x128xf32>
    %364 = arith.addf %361, %363 : vector<2x128xf32>
    %365 = vector.broadcast %53 : vector<1x128xf32> to vector<2x128xf32>
    %366 = arith.addf %364, %365 : vector<2x128xf32>
    %367 = vector.extract_strided_slice %360 {offsets = [0, 128], sizes = [2, 128], strides = [1, 1]} : vector<2x256xf32> to vector<2x128xf32>
    %368 = vector.extract_strided_slice %51 {offsets = [0, 2, 128], sizes = [2, 1, 128], strides = [1, 1, 1]} : vector<2x8x256xf32> to vector<2x1x128xf32>
    %369 = vector.shape_cast %368 : vector<2x1x128xf32> to vector<2x128xf32>
    %370 = arith.addf %367, %369 : vector<2x128xf32>
    %371 = vector.broadcast %54 : vector<1x128xf32> to vector<2x128xf32>
    %372 = arith.addf %370, %371 : vector<2x128xf32>
    %373 = vector.extract_strided_slice %366 {offsets = [0, 0], sizes = [2, 96], strides = [1, 1]} : vector<2x128xf32> to vector<2x96xf32>
    %374 = arith.negf %373 : vector<2x96xf32>
    %375 = math.exp %374 : vector<2x96xf32>
    %cst_78 = arith.constant 1.000000e+00 : f32
    %376 = vector.broadcast %cst_78 : f32 to vector<2x96xf32>
    %377 = arith.addf %376, %375 : vector<2x96xf32>
    %378 = arith.divf %376, %377 : vector<2x96xf32>
    %379 = vector.extract_strided_slice %366 {offsets = [0, 96], sizes = [2, 32], strides = [1, 1]} : vector<2x128xf32> to vector<2x32xf32>
    %380 = math.tanh %379 : vector<2x32xf32>
    %381 = vector.extract_strided_slice %378 {offsets = [0, 0], sizes = [2, 32], strides = [1, 1]} : vector<2x96xf32> to vector<2x32xf32>
    %382 = vector.extract_strided_slice %378 {offsets = [0, 32], sizes = [2, 32], strides = [1, 1]} : vector<2x96xf32> to vector<2x32xf32>
    %383 = vector.extract_strided_slice %378 {offsets = [0, 64], sizes = [2, 32], strides = [1, 1]} : vector<2x96xf32> to vector<2x32xf32>
    %384 = arith.mulf %382, %334 : vector<2x32xf32>
    %385 = arith.mulf %381, %380 : vector<2x32xf32>
    %386 = arith.addf %384, %385 : vector<2x32xf32>
    %387 = math.tanh %386 : vector<2x32xf32>
    %388 = arith.mulf %383, %387 : vector<2x32xf32>
    %389 = vector.extract_strided_slice %372 {offsets = [0, 0], sizes = [2, 96], strides = [1, 1]} : vector<2x128xf32> to vector<2x96xf32>
    %390 = arith.negf %389 : vector<2x96xf32>
    %391 = math.exp %390 : vector<2x96xf32>
    %cst_79 = arith.constant 1.000000e+00 : f32
    %392 = vector.broadcast %cst_79 : f32 to vector<2x96xf32>
    %393 = arith.addf %392, %391 : vector<2x96xf32>
    %394 = arith.divf %392, %393 : vector<2x96xf32>
    %395 = vector.extract_strided_slice %372 {offsets = [0, 96], sizes = [2, 32], strides = [1, 1]} : vector<2x128xf32> to vector<2x32xf32>
    %396 = math.tanh %395 : vector<2x32xf32>
    %397 = vector.extract_strided_slice %394 {offsets = [0, 0], sizes = [2, 32], strides = [1, 1]} : vector<2x96xf32> to vector<2x32xf32>
    %398 = vector.extract_strided_slice %394 {offsets = [0, 32], sizes = [2, 32], strides = [1, 1]} : vector<2x96xf32> to vector<2x32xf32>
    %399 = vector.extract_strided_slice %394 {offsets = [0, 64], sizes = [2, 32], strides = [1, 1]} : vector<2x96xf32> to vector<2x32xf32>
    %400 = arith.mulf %398, %350 : vector<2x32xf32>
    %401 = arith.mulf %397, %396 : vector<2x32xf32>
    %402 = arith.addf %400, %401 : vector<2x32xf32>
    %403 = math.tanh %402 : vector<2x32xf32>
    %404 = arith.mulf %399, %403 : vector<2x32xf32>
    %c0_80 = arith.constant 0 : index
    %c6_81 = arith.constant 6 : index
    %c0_82 = arith.constant 0 : index
    %405 = vector.load %arg17[%c0_80, %c6_81, %c0_82] : memref<2x8x64xf32, #tpu.memory_space<vmem>>, vector<2x1x32xf32>
    %406 = vector.shape_cast %405 : vector<2x1x32xf32> to vector<2x32xf32>
    %407 = vector.shape_cast %388 : vector<2x32xf32> to vector<2x1x32xf32>
    tpu.vector_store %arg17[%c0_80, %c6_81, %c0_82], %407 {strides = array<i32>} : memref<2x8x64xf32, #tpu.memory_space<vmem>>, vector<2x1x32xf32>,
    %c0_83 = arith.constant 0 : index
    %c1_84 = arith.constant 1 : index
    %c32_85 = arith.constant 32 : index
    %408 = vector.load %arg17[%c0_83, %c1_84, %c32_85] : memref<2x8x64xf32, #tpu.memory_space<vmem>>, vector<2x1x32xf32>
    %409 = vector.shape_cast %408 : vector<2x1x32xf32> to vector<2x32xf32>
    %410 = vector.shape_cast %404 : vector<2x32xf32> to vector<2x1x32xf32>
    tpu.vector_store %arg17[%c0_83, %c1_84, %c32_85], %410 {strides = array<i32>} : memref<2x8x64xf32, #tpu.memory_space<vmem>>, vector<2x1x32xf32>,
    %411 = tpu.concatenate %388, %404 in 1 : vector<2x32xf32>, vector<2x32xf32> -> vector<2x64xf32>
    %cst_86 = arith.constant dense<0.000000e+00> : vector<2x256xf32>
    %412 = tpu.matmul %411, %52, %cst_86 {dimension_numbers = #tpu.dot_dimension_numbers<[1], [0], [0], [1], [0, 0, 1, 1], [], []>} : vector<2x64xf32>, vector<64x256xf32>, vector<2x256xf32> -> vector<2x256xf32>
    %413 = vector.extract_strided_slice %412 {offsets = [0, 0], sizes = [2, 128], strides = [1, 1]} : vector<2x256xf32> to vector<2x128xf32>
    %414 = vector.extract_strided_slice %51 {offsets = [0, 6, 0], sizes = [2, 1, 128], strides = [1, 1, 1]} : vector<2x8x256xf32> to vector<2x1x128xf32>
    %415 = vector.shape_cast %414 : vector<2x1x128xf32> to vector<2x128xf32>
    %416 = arith.addf %413, %415 : vector<2x128xf32>
    %417 = vector.broadcast %53 : vector<1x128xf32> to vector<2x128xf32>
    %418 = arith.addf %416, %417 : vector<2x128xf32>
    %419 = vector.extract_strided_slice %412 {offsets = [0, 128], sizes = [2, 128], strides = [1, 1]} : vector<2x256xf32> to vector<2x128xf32>
    %420 = vector.extract_strided_slice %51 {offsets = [0, 1, 128], sizes = [2, 1, 128], strides = [1, 1, 1]} : vector<2x8x256xf32> to vector<2x1x128xf32>
    %421 = vector.shape_cast %420 : vector<2x1x128xf32> to vector<2x128xf32>
    %422 = arith.addf %419, %421 : vector<2x128xf32>
    %423 = vector.broadcast %54 : vector<1x128xf32> to vector<2x128xf32>
    %424 = arith.addf %422, %423 : vector<2x128xf32>
    %425 = vector.extract_strided_slice %418 {offsets = [0, 0], sizes = [2, 96], strides = [1, 1]} : vector<2x128xf32> to vector<2x96xf32>
    %426 = arith.negf %425 : vector<2x96xf32>
    %427 = math.exp %426 : vector<2x96xf32>
    %cst_87 = arith.constant 1.000000e+00 : f32
    %428 = vector.broadcast %cst_87 : f32 to vector<2x96xf32>
    %429 = arith.addf %428, %427 : vector<2x96xf32>
    %430 = arith.divf %428, %429 : vector<2x96xf32>
    %431 = vector.extract_strided_slice %418 {offsets = [0, 96], sizes = [2, 32], strides = [1, 1]} : vector<2x128xf32> to vector<2x32xf32>
    %432 = math.tanh %431 : vector<2x32xf32>
    %433 = vector.extract_strided_slice %430 {offsets = [0, 0], sizes = [2, 32], strides = [1, 1]} : vector<2x96xf32> to vector<2x32xf32>
    %434 = vector.extract_strided_slice %430 {offsets = [0, 32], sizes = [2, 32], strides = [1, 1]} : vector<2x96xf32> to vector<2x32xf32>
    %435 = vector.extract_strided_slice %430 {offsets = [0, 64], sizes = [2, 32], strides = [1, 1]} : vector<2x96xf32> to vector<2x32xf32>
    %436 = arith.mulf %434, %386 : vector<2x32xf32>
    %437 = arith.mulf %433, %432 : vector<2x32xf32>
    %438 = arith.addf %436, %437 : vector<2x32xf32>
    %439 = math.tanh %438 : vector<2x32xf32>
    %440 = arith.mulf %435, %439 : vector<2x32xf32>
    %441 = vector.extract_strided_slice %424 {offsets = [0, 0], sizes = [2, 96], strides = [1, 1]} : vector<2x128xf32> to vector<2x96xf32>
    %442 = arith.negf %441 : vector<2x96xf32>
    %443 = math.exp %442 : vector<2x96xf32>
    %cst_88 = arith.constant 1.000000e+00 : f32
    %444 = vector.broadcast %cst_88 : f32 to vector<2x96xf32>
    %445 = arith.addf %444, %443 : vector<2x96xf32>
    %446 = arith.divf %444, %445 : vector<2x96xf32>
    %447 = vector.extract_strided_slice %424 {offsets = [0, 96], sizes = [2, 32], strides = [1, 1]} : vector<2x128xf32> to vector<2x32xf32>
    %448 = math.tanh %447 : vector<2x32xf32>
    %449 = vector.extract_strided_slice %446 {offsets = [0, 0], sizes = [2, 32], strides = [1, 1]} : vector<2x96xf32> to vector<2x32xf32>
    %450 = vector.extract_strided_slice %446 {offsets = [0, 32], sizes = [2, 32], strides = [1, 1]} : vector<2x96xf32> to vector<2x32xf32>
    %451 = vector.extract_strided_slice %446 {offsets = [0, 64], sizes = [2, 32], strides = [1, 1]} : vector<2x96xf32> to vector<2x32xf32>
    %452 = arith.mulf %450, %402 : vector<2x32xf32>
    %453 = arith.mulf %449, %448 : vector<2x32xf32>
    %454 = arith.addf %452, %453 : vector<2x32xf32>
    %455 = math.tanh %454 : vector<2x32xf32>
    %456 = arith.mulf %451, %455 : vector<2x32xf32>
    %c0_89 = arith.constant 0 : index
    %c7_90 = arith.constant 7 : index
    %c0_91 = arith.constant 0 : index
    %457 = vector.load %arg17[%c0_89, %c7_90, %c0_91] : memref<2x8x64xf32, #tpu.memory_space<vmem>>, vector<2x1x32xf32>
    %458 = vector.shape_cast %457 : vector<2x1x32xf32> to vector<2x32xf32>
    %459 = vector.shape_cast %440 : vector<2x32xf32> to vector<2x1x32xf32>
    tpu.vector_store %arg17[%c0_89, %c7_90, %c0_91], %459 {strides = array<i32>} : memref<2x8x64xf32, #tpu.memory_space<vmem>>, vector<2x1x32xf32>,
    %c0_92 = arith.constant 0 : index
    %c0_93 = arith.constant 0 : index
    %c32_94 = arith.constant 32 : index
    %460 = vector.load %arg17[%c0_92, %c0_93, %c32_94] : memref<2x8x64xf32, #tpu.memory_space<vmem>>, vector<2x1x32xf32>
    %461 = vector.shape_cast %460 : vector<2x1x32xf32> to vector<2x32xf32>
    %462 = vector.shape_cast %456 : vector<2x32xf32> to vector<2x1x32xf32>
    tpu.vector_store %arg17[%c0_92, %c0_93, %c32_94], %462 {strides = array<i32>} : memref<2x8x64xf32, #tpu.memory_space<vmem>>, vector<2x1x32xf32>,
    %c0_95 = arith.constant 0 : index
    %c0_96 = arith.constant 0 : index
    %c0_97 = arith.constant 0 : index
    %463 = vector.load %arg17[%c0_95, %c0_96, %c0_97] : memref<2x8x64xf32, #tpu.memory_space<vmem>>, vector<2x8x64xf32>
    %464 = vector.shape_cast %463 : vector<2x8x64xf32> to vector<16x64xf32>
    %c0_98 = arith.constant 0 : index
    %c0_99 = arith.constant 0 : index
    %465 = vector.load %arg11[%c0_98, %c0_99] : memref<8x64xf32, #tpu.memory_space<vmem>>, vector<8x64xf32>
    %cst_100 = arith.constant dense<0.000000e+00> : vector<2x64xf32>
    %466 = tpu.matmul %3, %465, %cst_100 {dimension_numbers = #tpu.dot_dimension_numbers<[1], [0], [0], [1], [0, 0, 1, 1], [], []>} : vector<2x8xf32>, vector<8x64xf32>, vector<2x64xf32> -> vector<2x64xf32>
    %c0_101 = arith.constant 0 : index
    %c0_102 = arith.constant 0 : index
    %467 = vector.load %arg12[%c0_101, %c0_102] : memref<64x64xf32, #tpu.memory_space<vmem>>, vector<64x64xf32>
    %cst_103 = arith.constant dense<0.000000e+00> : vector<16x64xf32>
    %468 = tpu.matmul %464, %467, %cst_103 {dimension_numbers = #tpu.dot_dimension_numbers<[1], [0], [0], [1], [0, 0, 1, 1], [], []>} : vector<16x64xf32>, vector<64x64xf32>, vector<16x64xf32> -> vector<16x64xf32>
    %469 = vector.shape_cast %468 : vector<16x64xf32> to vector<2x8x64xf32>
    %470 = vector.shape_cast %466 : vector<2x64xf32> to vector<2x1x64xf32>
    %471 = vector.broadcast %470 : vector<2x1x64xf32> to vector<2x8x64xf32>
    %472 = arith.addf %469, %471 : vector<2x8x64xf32>
    %c0_104 = arith.constant 0 : index
    %c0_105 = arith.constant 0 : index
    %473 = vector.load %arg13[%c0_104, %c0_105] : memref<1x64xf32, #tpu.memory_space<vmem>>, vector<1x64xf32>
    %474 = vector.shape_cast %473 : vector<1x64xf32> to vector<1x1x64xf32>
    %475 = vector.broadcast %474 : vector<1x1x64xf32> to vector<2x8x64xf32>
    %476 = arith.addf %472, %475 : vector<2x8x64xf32>
    %477 = math.tanh %476 : vector<2x8x64xf32>
    %cst_106 = arith.constant dense<0xFF800000> : vector<2x8xf32>
    %478 = vector.multi_reduction <maximumf>, %477, %cst_106 [2] : vector<2x8x64xf32> to vector<2x8xf32>
    %479 = vector.shape_cast %478 : vector<2x8xf32> to vector<2x8x1xf32>
    %480 = vector.broadcast %479 : vector<2x8x1xf32> to vector<2x8x64xf32>
    %481 = arith.subf %477, %480 : vector<2x8x64xf32>
    %482 = math.exp %481 : vector<2x8x64xf32>
    %cst_107 = arith.constant dense<0.000000e+00> : vector<2x8xf32>
    %483 = vector.multi_reduction <add>, %482, %cst_107 [2] : vector<2x8x64xf32> to vector<2x8xf32>
    %484 = vector.shape_cast %483 : vector<2x8xf32> to vector<2x8x1xf32>
    %485 = tpu.reciprocal %484 {approx = true} : vector<2x8x1xf32> -> vector<2x8x1xf32>
    %486 = vector.broadcast %485 : vector<2x8x1xf32> to vector<2x8x64xf32>
    %487 = arith.mulf %482, %486 : vector<2x8x64xf32>
    %cst_108 = arith.constant 6.400000e+01 : f32
    %488 = vector.broadcast %cst_108 : f32 to vector<2x8x64xf32>
    %489 = arith.mulf %487, %488 : vector<2x8x64xf32>
    %490 = arith.mulf %489, %463 : vector<2x8x64xf32>
    %c0_109 = arith.constant 0 : index
    %c0_110 = arith.constant 0 : index
    %491 = vector.load %arg14[%c0_109, %c0_110] : memref<1x64xf32, #tpu.memory_space<vmem>>, vector<1x64xf32>
    %492 = vector.shape_cast %491 : vector<1x64xf32> to vector<1x1x64xf32>
    %493 = vector.broadcast %492 : vector<1x1x64xf32> to vector<2x8x64xf32>
    %494 = arith.mulf %490, %493 : vector<2x8x64xf32>
    %cst_111 = arith.constant dense<0.000000e+00> : vector<2x8xf32>
    %495 = vector.multi_reduction <add>, %494, %cst_111 [2] : vector<2x8x64xf32> to vector<2x8xf32>
    %c0_112 = arith.constant 0 : index
    %c0_113 = arith.constant 0 : index
    %496 = vector.load %arg15[%c0_112, %c0_113] : memref<1x1xf32, #tpu.memory_space<vmem>>, vector<1x1xf32>
    %497 = vector.broadcast %496 : vector<1x1xf32> to vector<2x8xf32>
    %498 = arith.addf %495, %497 : vector<2x8xf32>
    %c0_114 = arith.constant 0 : index
    %c0_115 = arith.constant 0 : index
    %499 = vector.load %arg16[%c0_114, %c0_115] : memref<2x8xf32, #tpu.memory_space<vmem>>, vector<2x8xf32>
    tpu.vector_store %arg16[%c0_114, %c0_115], %498 {strides = array<i32>} : memref<2x8xf32, #tpu.memory_space<vmem>>, vector<2x8xf32>,
    return
  }
  func.func @transform_0(%arg0: i32) -> (i32, i32) {
    %c0_i32 = arith.constant 0 : i32
    %c0_i32_0 = arith.constant 0 : i32
    return %arg0, %c0_i32 : i32, i32
  }
  func.func @transform_1(%arg0: i32) -> (i32, i32) {
    %c0_i32 = arith.constant 0 : i32
    %c0_i32_0 = arith.constant 0 : i32
    return %arg0, %c0_i32 : i32, i32
  }
  func.func @transform_2(%arg0: i32) -> (i32, i32, i32) {
    %c0_i32 = arith.constant 0 : i32
    %c0_i32_0 = arith.constant 0 : i32
    %c0_i32_1 = arith.constant 0 : i32
    return %arg0, %c0_i32, %c0_i32_0 : i32, i32, i32
  }
  func.func @transform_3(%arg0: i32) -> (i32, i32) {
    %c0_i32 = arith.constant 0 : i32
    %c0_i32_0 = arith.constant 0 : i32
    %c0_i32_1 = arith.constant 0 : i32
    return %c0_i32, %c0_i32_0 : i32, i32
  }
  func.func @transform_4(%arg0: i32) -> (i32, i32) {
    %c0_i32 = arith.constant 0 : i32
    %c0_i32_0 = arith.constant 0 : i32
    %c0_i32_1 = arith.constant 0 : i32
    return %c0_i32, %c0_i32_0 : i32, i32
  }
  func.func @transform_5(%arg0: i32) -> (i32, i32) {
    %c0_i32 = arith.constant 0 : i32
    %c0_i32_0 = arith.constant 0 : i32
    %c0_i32_1 = arith.constant 0 : i32
    return %c0_i32, %c0_i32_0 : i32, i32
  }
  func.func @transform_6(%arg0: i32) -> (i32, i32) {
    %c0_i32 = arith.constant 0 : i32
    %c0_i32_0 = arith.constant 0 : i32
    %c0_i32_1 = arith.constant 0 : i32
    return %c0_i32, %c0_i32_0 : i32, i32
  }
  func.func @transform_7(%arg0: i32) -> (i32, i32) {
    %c0_i32 = arith.constant 0 : i32
    %c0_i32_0 = arith.constant 0 : i32
    %c0_i32_1 = arith.constant 0 : i32
    return %c0_i32, %c0_i32_0 : i32, i32
  }
  func.func @transform_8(%arg0: i32) -> (i32, i32) {
    %c0_i32 = arith.constant 0 : i32
    %c0_i32_0 = arith.constant 0 : i32
    %c0_i32_1 = arith.constant 0 : i32
    return %c0_i32, %c0_i32_0 : i32, i32
  }
  func.func @transform_9(%arg0: i32) -> (i32, i32) {
    %c0_i32 = arith.constant 0 : i32
    %c0_i32_0 = arith.constant 0 : i32
    %c0_i32_1 = arith.constant 0 : i32
    return %c0_i32, %c0_i32_0 : i32, i32
  }
  func.func @transform_10(%arg0: i32) -> (i32, i32) {
    %c0_i32 = arith.constant 0 : i32
    %c0_i32_0 = arith.constant 0 : i32
    %c0_i32_1 = arith.constant 0 : i32
    return %c0_i32, %c0_i32_0 : i32, i32
  }
  func.func @transform_11(%arg0: i32) -> (i32, i32) {
    %c0_i32 = arith.constant 0 : i32
    %c0_i32_0 = arith.constant 0 : i32
    %c0_i32_1 = arith.constant 0 : i32
    return %c0_i32, %c0_i32_0 : i32, i32
  }
  func.func @transform_12(%arg0: i32) -> (i32, i32) {
    %c0_i32 = arith.constant 0 : i32
    %c0_i32_0 = arith.constant 0 : i32
    %c0_i32_1 = arith.constant 0 : i32
    return %c0_i32, %c0_i32_0 : i32, i32
  }
  func.func @transform_13(%arg0: i32) -> (i32, i32) {
    %c0_i32 = arith.constant 0 : i32
    %c0_i32_0 = arith.constant 0 : i32
    %c0_i32_1 = arith.constant 0 : i32
    return %c0_i32, %c0_i32_0 : i32, i32
  }
  func.func @transform_14(%arg0: i32) -> (i32, i32) {
    %c0_i32 = arith.constant 0 : i32
    %c0_i32_0 = arith.constant 0 : i32
    %c0_i32_1 = arith.constant 0 : i32
    return %c0_i32, %c0_i32_0 : i32, i32
  }
  func.func @transform_15(%arg0: i32) -> (i32, i32) {
    %c0_i32 = arith.constant 0 : i32
    %c0_i32_0 = arith.constant 0 : i32
    return %arg0, %c0_i32 : i32, i32
  }
}

</mosaic_0001>

<llo_original>
// kernel: tpu_custom_call.1
$region0: #{tpu_custom_call.1}
  #allocation0 [shape = 'u32[]', space=smem, size = 0x4, offset = 0x4, fixed_abs, tag = 'smem constant byte address 0x4 - core index']
  #allocation1 [shape = 'u32[72,128]{1,0:T(1,128)}', space=vmem, size = 0x9000, scoped, tag = 'internal scratch']
  #allocation2 [shape = 'f32[2,8,64]{2,1,0:T(8,128)}', space=vmem, size = 0x2000, scoped, tag = 'scratch operand']
  #allocation3 [shape = 'f32[1,1]{1,0:T(1,128)S(1)}', space=vmem, size = 0x200, scoped, tag = 'scoped memory for tpu_custom_call.1']
  %s0 = inlined_call_operand.hbm [shape: s32[2,8], index: 0, kind: input, shape index: {}]
  %s1 = inlined_call_operand.hbm [shape: s32[2,8], index: 1, kind: input, shape index: {}]
  %s2 = inlined_call_operand.vmem [shape: f32[2,8,8], index: 2, kind: input, shape index: {}]
  %s3 = inlined_call_operand.vmem [shape: f32[10,8], index: 3, kind: input, shape index: {}]
  %s4 = inlined_call_operand.hbm [shape: f32[8,8], index: 4, kind: input, shape index: {}]
  %s5 = inlined_call_operand.hbm [shape: f32[8,8], index: 5, kind: input, shape index: {}]
  %s6 = inlined_call_operand.hbm [shape: f32[1,8], index: 6, kind: input, shape index: {}]
  %s7 = inlined_call_operand.vmem [shape: f32[8,256], index: 7, kind: input, shape index: {}]
  %s8 = inlined_call_operand.hbm [shape: f32[64,256], index: 8, kind: input, shape index: {}]
  %s9 = inlined_call_operand.vmem [shape: f32[2,128], index: 9, kind: input, shape index: {}]
  %s10 = inlined_call_operand.hbm [shape: f32[8,64], index: 10, kind: input, shape index: {}]
  %s11 = inlined_call_operand.hbm [shape: f32[64,64], index: 11, kind: input, shape index: {}]
  %s12 = inlined_call_operand.vmem [shape: f32[1,64], index: 12, kind: input, shape index: {}]
  %s13 = inlined_call_operand.vmem [shape: f32[1,64], index: 13, kind: input, shape index: {}]
  %s14 = inlined_call_operand.<no memory space> [shape: f32[1,1], index: 14, kind: input, shape index: {}]
  %s15 = inlined_call_operand.hbm [shape: f32[2,8], index: 15, kind: output, shape index: {}]
  %s16 = sld [smem:[#allocation0]]
  $region102: #{tpu_custom_call.1} parent=0
    _
  %s18 = ssub.s32 1, %s16
  %s19 = scalar_select 0, %s18, %s16
  %v20 = vstv %s14
  %21 = vst [vmem:[#allocation3] sm:$0x1] %v20
  $region1: #{tpu_custom_call.1} parent=0
    #allocation4 [shape = 'u8[1024]{0}', space=vmem, size = 0x400, scoped, tag = 'input window, operand 0, single buffered']
    #allocation5 [shape = 's32[1]{0}', space=sflag, size = 0x4, scoped, tag = 'scoped memory for tpu_custom_call.1']
    #allocation6 [shape = 's32[1]{0}', space=sflag, size = 0x4, scoped, tag = 'scoped memory for tpu_custom_call.1']
    #allocation7 [shape = 'u8[1024]{0}', space=vmem, size = 0x400, scoped, tag = 'input window, operand 1, single buffered']
    #allocation8 [shape = 's32[1]{0}', space=sflag, size = 0x4, scoped, tag = 'scoped memory for tpu_custom_call.1']
    #allocation9 [shape = 'u8[4096]{0}', space=vmem, size = 0x1000, scoped, tag = 'input window, operand 4, single buffered']
    #allocation10 [shape = 'u8[4096]{0}', space=vmem, size = 0x1000, scoped, tag = 'input window, operand 5, single buffered']
    #allocation11 [shape = 's32[1]{0}', space=sflag, size = 0x4, scoped, tag = 'scoped memory for tpu_custom_call.1']
    #allocation12 [shape = 'u8[512]{0}', space=vmem, size = 0x400, scoped, tag = 'input window, operand 6, single buffered']
    #allocation13 [shape = 'u8[65536]{0}', space=vmem, size = 0x10000, scoped, tag = 'input window, operand 8, single buffered']
    #allocation14 [shape = 's32[1]{0}', space=sflag, size = 0x4, scoped, tag = 'scoped memory for tpu_custom_call.1']
    #allocation15 [shape = 'u8[4096]{0}', space=vmem, size = 0x1000, scoped, tag = 'input window, operand 10, single buffered']
    #allocation16 [shape = 'u8[32768]{0}', space=vmem, size = 0x8000, scoped, tag = 'input window, operand 11, single buffered']
    #allocation17 [shape = 's32[1]{0}', space=sflag, size = 0x4, scoped, tag = 'scoped memory for tpu_custom_call.1']
    #allocation18 [shape = 'u8[1024]{0}', space=vmem, size = 0x400, scoped, tag = 'output window, operand 0, single buffered']
    %22 = vsyncpa [#allocation5], 0
    %23 = vsyncpa [#allocation8], 0
    %24 = vsyncpa [#allocation11], 0
    %25 = vsyncpa [#allocation14], 0
    %26 = vsyncpa [#allocation17], 0
    %27 = vsyncpa [#allocation6], 0
    // Predicated region
    $region2: #{tpu_custom_call.1} parent=1 // pred_check
      _
    $region3: #{tpu_custom_call.1} parent=1 // pred_check_branch
      %29 = sbr.rel (0) target = $region5
    $region4: #{tpu_custom_call.1} parent=1 // pred_region
      %31 = vsyncadd [#allocation5], 0
      %s33 = sshll.u32 %s0, 4
      %s34 = int_to_ptr.hbm [resolvable:$true] %s33
      %s35 = sshll.u32 [#allocation4], 4
      %s36 = int_to_ptr.vmem [resolvable:$true] %s35
      %38 = dma.hbm_to_vmem [thread:$0]  %s34, 32, %s36, [#allocation5]
    $region5: #{tpu_custom_call.1} parent=1 // pred_fallthru
      _
    // Predicated region
    $region6: #{tpu_custom_call.1} parent=1 // pred_check
      _
    $region7: #{tpu_custom_call.1} parent=1 // pred_check_branch
      %40 = sbr.rel (0) target = $region9
    $region8: #{tpu_custom_call.1} parent=1 // pred_region
      %42 = vsyncadd [#allocation8], 0
      %s44 = sshll.u32 %s1, 4
      %s45 = int_to_ptr.hbm [resolvable:$true] %s44
      %s46 = sshll.u32 [#allocation7], 4
      %s47 = int_to_ptr.vmem [resolvable:$true] %s46
      %49 = dma.hbm_to_vmem [thread:$0]  %s45, 32, %s47, [#allocation8]
    $region9: #{tpu_custom_call.1} parent=1 // pred_fallthru
      _
    // Predicated region
    $region10: #{tpu_custom_call.1} parent=1 // pred_check
      _
    $region11: #{tpu_custom_call.1} parent=1 // pred_check_branch
      %51 = sbr.rel (0) target = $region13
    $region12: #{tpu_custom_call.1} parent=1 // pred_region
      _
    $region13: #{tpu_custom_call.1} parent=1 // pred_fallthru
      _
    // Predicated region
    $region14: #{tpu_custom_call.1} parent=1 // pred_check
      _
    $region15: #{tpu_custom_call.1} parent=1 // pred_check_branch
      %53 = sbr.rel (0) target = $region17
    $region16: #{tpu_custom_call.1} parent=1 // pred_region
      _
    $region17: #{tpu_custom_call.1} parent=1 // pred_fallthru
      _
    // Predicated region
    $region18: #{tpu_custom_call.1} parent=1 // pred_check
      _
    $region19: #{tpu_custom_call.1} parent=1 // pred_check_branch
      %55 = sbr.rel (0) target = $region21
    $region20: #{tpu_custom_call.1} parent=1 // pred_region
      %57 = vsyncadd [#allocation8], 0
      %s59 = sshll.u32 %s4, 4
      %s60 = int_to_ptr.hbm [resolvable:$true] %s59
      %s61 = sshll.u32 [#allocation9], 4
      %s62 = int_to_ptr.vmem [resolvable:$true] %s61
      %64 = dma.hbm_to_vmem [thread:$0]  %s60, 128, %s62, [#allocation8]
    $region21: #{tpu_custom_call.1} parent=1 // pred_fallthru
      _
    // Predicated region
    $region22: #{tpu_custom_call.1} parent=1 // pred_check
      _
    $region23: #{tpu_custom_call.1} parent=1 // pred_check_branch
      %66 = sbr.rel (0) target = $region25
    $region24: #{tpu_custom_call.1} parent=1 // pred_region
      %68 = vsyncadd [#allocation11], 0
      %s70 = sshll.u32 %s5, 4
      %s71 = int_to_ptr.hbm [resolvable:$true] %s70
      %s72 = sshll.u32 [#allocation10], 4
      %s73 = int_to_ptr.vmem [resolvable:$true] %s72
      %75 = dma.hbm_to_vmem [thread:$0]  %s71, 128, %s73, [#allocation11]
    $region25: #{tpu_custom_call.1} parent=1 // pred_fallthru
      _
    // Predicated region
    $region26: #{tpu_custom_call.1} parent=1 // pred_check
      _
    $region27: #{tpu_custom_call.1} parent=1 // pred_check_branch
      %77 = sbr.rel (0) target = $region29
    $region28: #{tpu_custom_call.1} parent=1 // pred_region
      %79 = vsyncadd [#allocation11], 0
      %s81 = sshll.u32 %s6, 4
      %s82 = int_to_ptr.hbm [resolvable:$true] %s81
      %s83 = sshll.u32 [#allocation12], 4
      %s84 = int_to_ptr.vmem [resolvable:$true] %s83
      %86 = dma.hbm_to_vmem [thread:$0]  %s82, 16, %s84, [#allocation11]
    $region29: #{tpu_custom_call.1} parent=1 // pred_fallthru
      _
    // Predicated region
    $region30: #{tpu_custom_call.1} parent=1 // pred_check
      _
    $region31: #{tpu_custom_call.1} parent=1 // pred_check_branch
      %88 = sbr.rel (0) target = $region33
    $region32: #{tpu_custom_call.1} parent=1 // pred_region
      _
    $region33: #{tpu_custom_call.1} parent=1 // pred_fallthru
      _
    // Predicated region
    $region34: #{tpu_custom_call.1} parent=1 // pred_check
      _
    $region35: #{tpu_custom_call.1} parent=1 // pred_check_branch
      %90 = sbr.rel (0) target = $region37
    $region36: #{tpu_custom_call.1} parent=1 // pred_region
      %92 = vsyncadd [#allocation14], 0
      %s93 = sshll.u32 %s8, 4
      %s94 = int_to_ptr.hbm [resolvable:$true] %s93
      %s95 = sshll.u32 [#allocation13], 4
      %s96 = int_to_ptr.vmem [resolvable:$true] %s95
      %101 = dma.hbm_to_vmem [thread:$0]  %s94, 2048, %s96, [#allocation14], 256, 256, 16
    $region37: #{tpu_custom_call.1} parent=1 // pred_fallthru
      _
    // Predicated region
    $region38: #{tpu_custom_call.1} parent=1 // pred_check
      _
    $region39: #{tpu_custom_call.1} parent=1 // pred_check_branch
      %103 = sbr.rel (0) target = $region41
    $region40: #{tpu_custom_call.1} parent=1 // pred_region
      _
    $region41: #{tpu_custom_call.1} parent=1 // pred_fallthru
      _
    // Predicated region
    $region42: #{tpu_custom_call.1} parent=1 // pred_check
      _
    $region43: #{tpu_custom_call.1} parent=1 // pred_check_branch
      %105 = sbr.rel (0) target = $region45
    $region44: #{tpu_custom_call.1} parent=1 // pred_region
      %107 = vsyncadd [#allocation14], 0
      %s109 = sshll.u32 %s10, 4
      %s110 = int_to_ptr.hbm [resolvable:$true] %s109
      %s111 = sshll.u32 [#allocation15], 4
      %s112 = int_to_ptr.vmem [resolvable:$true] %s111
      %114 = dma.hbm_to_vmem [thread:$0]  %s110, 128, %s112, [#allocation14]
    $region45: #{tpu_custom_call.1} parent=1 // pred_fallthru
      _
    // Predicated region
    $region46: #{tpu_custom_call.1} parent=1 // pred_check
      _
    $region47: #{tpu_custom_call.1} parent=1 // pred_check_branch
      %116 = sbr.rel (0) target = $region49
    $region48: #{tpu_custom_call.1} parent=1 // pred_region
      %118 = vsyncadd [#allocation17], 0
      %s119 = sshll.u32 %s11, 4
      %s120 = int_to_ptr.hbm [resolvable:$true] %s119
      %s121 = sshll.u32 [#allocation16], 4
      %s122 = int_to_ptr.vmem [resolvable:$true] %s121
      %127 = dma.hbm_to_vmem [thread:$0]  %s120, 1024, %s122, [#allocation17], 128, 128, 8
    $region49: #{tpu_custom_call.1} parent=1 // pred_fallthru
      _
    // Predicated region
    $region50: #{tpu_custom_call.1} parent=1 // pred_check
      _
    $region51: #{tpu_custom_call.1} parent=1 // pred_check_branch
      %129 = sbr.rel (0) target = $region53
    $region52: #{tpu_custom_call.1} parent=1 // pred_region
      _
    $region53: #{tpu_custom_call.1} parent=1 // pred_fallthru
      _
    // Predicated region
    $region54: #{tpu_custom_call.1} parent=1 // pred_check
      _
    $region55: #{tpu_custom_call.1} parent=1 // pred_check_branch
      %131 = sbr.rel (0) target = $region57
    $region56: #{tpu_custom_call.1} parent=1 // pred_region
      _
    $region57: #{tpu_custom_call.1} parent=1 // pred_fallthru
      _
    // Predicated region
    $region58: #{tpu_custom_call.1} parent=1 // pred_check
      _
    $region59: #{tpu_custom_call.1} parent=1 // pred_check_branch
      %133 = sbr.rel (0) target = $region61
    $region60: #{tpu_custom_call.1} parent=1 // pred_region
      _
    $region61: #{tpu_custom_call.1} parent=1 // pred_fallthru
      _
    // Predicated region
    $region62: #{tpu_custom_call.1} parent=1 // pred_check
      _
    $region63: #{tpu_custom_call.1} parent=1 // pred_check_branch
      %135 = sbr.rel (0) target = $region65
    $region64: #{tpu_custom_call.1} parent=1 // pred_region
      %137 = dma.done [#allocation5], 32
    $region65: #{tpu_custom_call.1} parent=1 // pred_fallthru
      _
    // Predicated region
    $region66: #{tpu_custom_call.1} parent=1 // pred_check
      _
    $region67: #{tpu_custom_call.1} parent=1 // pred_check_branch
      %139 = sbr.rel (0) target = $region69
    $region68: #{tpu_custom_call.1} parent=1 // pred_region
      %141 = dma.done [#allocation8], 32
    $region69: #{tpu_custom_call.1} parent=1 // pred_fallthru
      _
    // Predicated region
    $region70: #{tpu_custom_call.1} parent=1 // pred_check
      _
    $region71: #{tpu_custom_call.1} parent=1 // pred_check_branch
      %143 = sbr.rel (0) target = $region73
    $region72: #{tpu_custom_call.1} parent=1 // pred_region
      %145 = dma.done [#allocation8], 128
    $region73: #{tpu_custom_call.1} parent=1 // pred_fallthru
      _
    // Predicated region
    $region74: #{tpu_custom_call.1} parent=1 // pred_check
      _
    $region75: #{tpu_custom_call.1} parent=1 // pred_check_branch
      %147 = sbr.rel (0) target = $region77
    $region76: #{tpu_custom_call.1} parent=1 // pred_region
      %149 = dma.done [#allocation11], 128
    $region77: #{tpu_custom_call.1} parent=1 // pred_fallthru
      _
    // Predicated region
    $region78: #{tpu_custom_call.1} parent=1 // pred_check
      _
    $region79: #{tpu_custom_call.1} parent=1 // pred_check_branch
      %151 = sbr.rel (0) target = $region81
    $region80: #{tpu_custom_call.1} parent=1 // pred_region
      %153 = dma.done [#allocation11], 16
    $region81: #{tpu_custom_call.1} parent=1 // pred_fallthru
      _
    // Predicated region
    $region82: #{tpu_custom_call.1} parent=1 // pred_check
      _
    $region83: #{tpu_custom_call.1} parent=1 // pred_check_branch
      %155 = sbr.rel (0) target = $region85
    $region84: #{tpu_custom_call.1} parent=1 // pred_region
      %157 = dma.done [#allocation14], 2048
    $region85: #{tpu_custom_call.1} parent=1 // pred_fallthru
      _
    // Predicated region
    $region86: #{tpu_custom_call.1} parent=1 // pred_check
      _
    $region87: #{tpu_custom_call.1} parent=1 // pred_check_branch
      %159 = sbr.rel (0) target = $region89
    $region88: #{tpu_custom_call.1} parent=1 // pred_region
      %161 = dma.done [#allocation14], 128
    $region89: #{tpu_custom_call.1} parent=1 // pred_fallthru
      _
    // Predicated region
    $region90: #{tpu_custom_call.1} parent=1 // pred_check
      _
    $region91: #{tpu_custom_call.1} parent=1 // pred_check_branch
      %163 = sbr.rel (0) target = $region93
    $region92: #{tpu_custom_call.1} parent=1 // pred_region
      %165 = dma.done [#allocation17], 1024
    $region93: #{tpu_custom_call.1} parent=1 // pred_fallthru
      _
    %v166 = vld [vmem:[%s2] sm:$0xff]
    %v167 = vld [vmem:[%s2 + $0x8] sm:$0xff]
    %vm168 = vcmask 64512
    %v169 = vsel %vm168, %v166, 0.0
    %v170 = vrot.slane %v169, 4
    %v171 = vadd.f32 %v169, %v170
    %v172 = vrot.slane %v171, 2
    %v173 = vadd.f32 %v171, %v172
    %v174 = vrot.slane %v173, 1
    %v175 = vadd.f32 %v173, %v174
    %v176 = vsel %vm168, %v167, 0.0
    %v177 = vrot.slane %v176, 4
    %v178 = vadd.f32 %v176, %v177
    %v179 = vrot.slane %v178, 2
    %v180 = vadd.f32 %v178, %v179
    %v181 = vrot.slane %v180, 1
    %v182 = vadd.f32 %v180, %v181
    %v183 = vrcp.pop 8.0
    %v184 = vmul.f32 8.0, %v183
    %v185 = vsub.f32 1.0, %v184
    %v186 = vmul.f32 %v183, %v185
    %v187 = vadd.f32 %v183, %v186
    %vm188 = vweird.f32 %v183
    %v189 = vsel %vm188, %v183, %v187
    %v190 = vmul.f32 %v175, %v189
    %v191 = vmul.f32 %v182, %v189
    %v192 = vld [vmem:[#allocation4] sm:$0x3]
    %v193 = vld [vmem:[#allocation7] sm:$0x3]
    %v194 = vlaneseq
    %v195 = vand.u32 %v194, 127
    %v196 = vperm.slane %v192, 0
    %v197 = vlaneseq
    %v198 = vshrl.u32 %v197, 7
    %200 = vset.pattern.permute.xlu0 %v198
    %201 = vperm.xlu0 %200, %v196
    %v202 = vpop.permute.xlu0 %201
    %v203 = vperm.slane %v192, 1
    %v204 = vlaneseq
    %v205 = vshrl.u32 %v204, 7
    %207 = vset.pattern.permute.xlu0 %v205
    %208 = vperm.xlu0 %207, %v203
    %v209 = vpop.permute.xlu0 %208
    %vm210 = vcmp.eq.s32.totalorder %v195, %v202
    %vm211 = vcmp.eq.s32.totalorder %v195, %v209
    %v212 = vadd.s32 %v193, 8
    %v213 = vperm.slane %v212, 0
    %v214 = vlaneseq
    %v215 = vshrl.u32 %v214, 7
    %217 = vset.pattern.permute.xlu0 %v215
    %218 = vperm.xlu0 %217, %v213
    %v219 = vpop.permute.xlu0 %218
    %v220 = vperm.slane %v212, 1
    %v221 = vlaneseq
    %v222 = vshrl.u32 %v221, 7
    %224 = vset.pattern.permute.xlu0 %v222
    %225 = vperm.xlu0 %224, %v220
    %v226 = vpop.permute.xlu0 %225
    %vm227 = vcmp.eq.s32.totalorder %v195, %v219
    %vm228 = vcmp.eq.s32.totalorder %v195, %v226
    %vm229 = vmor %vm210, %vm227
    %vm230 = vmor %vm211, %vm228
    %v231 = vsel %vm229, 1, 0
    %v232 = vsel %vm230, 1, 0
    %v233 = vcvt.s32.f32 %v231
    %v234 = vcvt.s32.f32 %v232
    %v235 = vld [vmem:[%s3] sm:$0xff]
    %v236 = vld [vmem:[%s3 + $0x8] sm:$0x3]
    %vm237 = vcmask 80896
    %v239 = vsel %vm237, %v233, 0
    %v242 = vsel %vm237, %v234, 0
    %vm244 = vcmask 1041408
    %v246 = vsel %vm244, %v236, 0
    %248 = vmatpush.msra.mxu0 0.0
    %249 = vmatpush.msra.mxu0 0.0
    %250 = vmatpush.msra.mxu0 0.0
    %251 = vmatpush.msra.mxu0 0.0
    %252 = vmatpush.msra.mxu0 0.0
    %253 = vmatpush.msra.mxu0 0.0
    %254 = vmatpush.msra.mxu0 0.0
    %255 = vmatpush.msra.mxu0 0.0
    %256 = vmatpush.msra.mxu0 0.0
    %257 = vmatpush.msra.mxu0 0.0
    %258 = vmatpush.msra.mxu0 0.0
    %259 = vmatpush.msra.mxu0 0.0
    %260 = vmatpush.msra.mxu0 0.0
    %261 = vmatpush.msra.mxu0 0.0
    %262 = vmatpush.msra.mxu0 %v246
    %263 = vmatpush.msra.mxu0 %v235
    %264 = vmatmul.f32.gmra.mxu0 %v239
    %v265 = vpop.f32.mrf.mxu0
    %v266 = vadd.f32 0.0, %v265
    %267 = vmatmul.f32.gmra.mxu0 %v242
    %v268 = vpop.f32.mrf.mxu0
    %v269 = vadd.f32 0.0, %v268
    %270 = vdwg.mxu0
    %v271 = vld [vmem:[#allocation9] sm:$0xff]
    %vm274 = vcmask 1041409
    %v275 = vsel %vm274, %v191, %v190
    %v276 = vsel %vm168, %v275, 0
    %278 = vmatpush.msra.mxu0 0.0
    %279 = vmatpush.msra.mxu0 0.0
    %280 = vmatpush.msra.mxu0 0.0
    %281 = vmatpush.msra.mxu0 0.0
    %282 = vmatpush.msra.mxu0 0.0
    %283 = vmatpush.msra.mxu0 0.0
    %284 = vmatpush.msra.mxu0 0.0
    %285 = vmatpush.msra.mxu0 0.0
    %286 = vmatpush.msra.mxu0 0.0
    %287 = vmatpush.msra.mxu0 0.0
    %288 = vmatpush.msra.mxu0 0.0
    %289 = vmatpush.msra.mxu0 0.0
    %290 = vmatpush.msra.mxu0 0.0
    %291 = vmatpush.msra.mxu0 0.0
    %292 = vmatpush.msra.mxu0 0.0
    %293 = vmatpush.msra.mxu0 %v271
    %294 = vmatmul.f32.gmra.mxu0 %v276
    %v295 = vpop.f32.mrf.mxu0
    %v296 = vadd.f32 0.0, %v295
    %297 = vdwg.mxu0
    %v298 = vld [vmem:[#allocation10] sm:$0xff]
    %v300 = vsel %vm168, %v266, 0
    %v303 = vsel %vm168, %v269, 0
    %305 = vmatpush.msra.mxu0 0.0
    %306 = vmatpush.msra.mxu0 0.0
    %307 = vmatpush.msra.mxu0 0.0
    %308 = vmatpush.msra.mxu0 0.0
    %309 = vmatpush.msra.mxu0 0.0
    %310 = vmatpush.msra.mxu0 0.0
    %311 = vmatpush.msra.mxu0 0.0
    %312 = vmatpush.msra.mxu0 0.0
    %313 = vmatpush.msra.mxu0 0.0
    %314 = vmatpush.msra.mxu0 0.0
    %315 = vmatpush.msra.mxu0 0.0
    %316 = vmatpush.msra.mxu0 0.0
    %317 = vmatpush.msra.mxu0 0.0
    %318 = vmatpush.msra.mxu0 0.0
    %319 = vmatpush.msra.mxu0 0.0
    %320 = vmatpush.msra.mxu0 %v298
    %321 = vmatmul.f32.gmra.mxu0 %v300
    %v322 = vpop.f32.mrf.mxu0
    %v323 = vadd.f32 0.0, %v322
    %324 = vmatmul.f32.gmra.mxu0 %v303
    %v325 = vpop.f32.mrf.mxu0
    %v326 = vadd.f32 0.0, %v325
    %327 = vdwg.mxu0
    %v329 = vrot.slane %v296, 1
    %v330 = vperm.slane %v296, 0
    %v331 = vperm.slane %v329, 0
    %v334 = vadd.f32 %v323, %v330
    %v335 = vadd.f32 %v326, %v331
    %v336 = vld [vmem:[#allocation12] sm:$0x1]
    %v338 = vperm.slane %v336, 0
    %v340 = vadd.f32 %v334, %v338
    %v341 = vadd.f32 %v335, %v338
    %v342 = vtanh.pop %v340
    %v343 = vtanh.pop %v341
    %v344 = vsel %vm168, %v342, -inf
    %345 = vmax.xlane.f32.xlu0 %v344
    %v346 = vpop.xlane.xlu0 %345
    %v347 = vsel %vm168, %v343, -inf
    %348 = vmax.xlane.f32.xlu0 %v347
    %v349 = vpop.xlane.xlu0 %348
    %v350 = vsub.f32 %v342, %v346
    %v351 = vsub.f32 %v343, %v349
    %v352 = vmul.f32 %v350, 1.442695
    %v353 = vpow.pop %v352
    %v354 = vmul.f32 %v351, 1.442695
    %v355 = vpow.pop %v354
    %v356 = vsel %vm168, %v353, 0.0
    %357 = vadd.xlane.f32.xlu0 %v356
    %v358 = vpop.xlane.xlu0 %357
    %v359 = vsel %vm168, %v355, 0.0
    %360 = vadd.xlane.f32.xlu0 %v359
    %v361 = vpop.xlane.xlu0 %360
    %v362 = vrcp.pop %v358
    %v363 = vrcp.pop %v361
    %v364 = vmul.f32 %v353, %v362
    %v365 = vmul.f32 %v355, %v363
    %v366 = vmul.f32 %v364, 8.0
    %v367 = vmul.f32 %v365, 8.0
    %v368 = vmul.f32 %v366, %v266
    %v369 = vmul.f32 %v367, %v269
    %v370 = vld [vmem:[%s7] sm:$0xff]
    %v371 = vld [vmem:[%s7 + $0x8] sm:$0xff]
    %v373 = vsel %vm168, %v368, 0
    %v376 = vsel %vm168, %v369, 0
    %378 = vmatpush.msra.mxu0 0.0
    %379 = vmatpush.msra.mxu0 0.0
    %380 = vmatpush.msra.mxu0 0.0
    %381 = vmatpush.msra.mxu0 0.0
    %382 = vmatpush.msra.mxu0 0.0
    %383 = vmatpush.msra.mxu0 0.0
    %384 = vmatpush.msra.mxu0 0.0
    %385 = vmatpush.msra.mxu0 0.0
    %386 = vmatpush.msra.mxu0 0.0
    %387 = vmatpush.msra.mxu0 0.0
    %388 = vmatpush.msra.mxu0 0.0
    %389 = vmatpush.msra.mxu0 0.0
    %390 = vmatpush.msra.mxu0 0.0
    %391 = vmatpush.msra.mxu0 0.0
    %392 = vmatpush.msra.mxu0 0.0
    %393 = vmatpush.msra.mxu0 %v370
    %394 = vmatmul.f32.gmra.mxu0 %v373
    %v395 = vpop.f32.mrf.mxu0
    %v396 = vadd.f32 0.0, %v395
    %397 = vmatmul.f32.gmra.mxu0 %v376
    %v398 = vpop.f32.mrf.mxu0
    %v399 = vadd.f32 0.0, %v398
    %400 = vdwg.mxu0
    %401 = vmatpush.msra.mxu0 0.0
    %402 = vmatpush.msra.mxu0 0.0
    %403 = vmatpush.msra.mxu0 0.0
    %404 = vmatpush.msra.mxu0 0.0
    %405 = vmatpush.msra.mxu0 0.0
    %406 = vmatpush.msra.mxu0 0.0
    %407 = vmatpush.msra.mxu0 0.0
    %408 = vmatpush.msra.mxu0 0.0
    %409 = vmatpush.msra.mxu0 0.0
    %410 = vmatpush.msra.mxu0 0.0
    %411 = vmatpush.msra.mxu0 0.0
    %412 = vmatpush.msra.mxu0 0.0
    %413 = vmatpush.msra.mxu0 0.0
    %414 = vmatpush.msra.mxu0 0.0
    %415 = vmatpush.msra.mxu0 0.0
    %416 = vmatpush.msra.mxu0 %v371
    %417 = vmatmul.f32.gmra.mxu0 %v373
    %v418 = vpop.f32.mrf.mxu0
    %v419 = vadd.f32 0.0, %v418
    %420 = vmatmul.f32.gmra.mxu0 %v376
    %v421 = vpop.f32.mrf.mxu0
    %v422 = vadd.f32 0.0, %v421
    %423 = vdwg.mxu0
    %v424 = vld [vmem:[#allocation13] sm:$0xff]
    %v425 = vld [vmem:[#allocation13 + $0x8] sm:$0xff]
    %v426 = vld [vmem:[#allocation13 + $0x10] sm:$0xff]
    %v427 = vld [vmem:[#allocation13 + $0x18] sm:$0xff]
    %v428 = vld [vmem:[#allocation13 + $0x20] sm:$0xff]
    %v429 = vld [vmem:[#allocation13 + $0x28] sm:$0xff]
    %v430 = vld [vmem:[#allocation13 + $0x30] sm:$0xff]
    %v431 = vld [vmem:[#allocation13 + $0x38] sm:$0xff]
    %v432 = vld [vmem:[#allocation13 + $0x40] sm:$0xff]
    %v433 = vld [vmem:[#allocation13 + $0x48] sm:$0xff]
    %v434 = vld [vmem:[#allocation13 + $0x50] sm:$0xff]
    %v435 = vld [vmem:[#allocation13 + $0x58] sm:$0xff]
    %v436 = vld [vmem:[#allocation13 + $0x60] sm:$0xff]
    %v437 = vld [vmem:[#allocation13 + $0x68] sm:$0xff]
    %v438 = vld [vmem:[#allocation13 + $0x70] sm:$0xff]
    %v439 = vld [vmem:[#allocation13 + $0x78] sm:$0xff]
    %v440 = vld [vmem:[%s9] sm:$0x1]
    %v441 = vld [vmem:[%s9 + $0x1] sm:$0x1]
    %v442 = vperm.slane %v440, 0
    %v443 = vxor.u32 %v442, 2147483648
    %v444 = vmul.f32 %v443, 1.442695
    %v445 = vpow.pop %v444
    %v446 = vadd.f32 %v445, 1.0
    %v447 = vrcp.pop %v446
    %v448 = vmul.f32 %v446, %v447
    %v449 = vsub.f32 1.0, %v448
    %v450 = vmul.f32 %v447, %v449
    %v451 = vadd.f32 %v447, %v450
    %vm452 = vweird.f32 %v446
    %vm453 = vweird.f32 %v447
    %vm454 = vmor %vm452, %vm453
    %v455 = vsel %vm454, %v447, %v451
    %v456 = vand.u32 2147483647, %v446
    %vm457 = vcmp.eq.f32.partialorder %v456, 8.507059e+37
    %v458 = vand.u32 %v446, 2147483648
    %v459 = vor.u32 1.1754944e-38, %v458
    %v460 = vsel %vm457, %v459, %v455
    %v461 = vmul.f32 1.0, %v460
    %v462 = vtanh.pop %v442
    %v463 = vmul.f32 %v461, 0.0
    %465 = vrot.lane.b32.xlu0 %v462, 32
    %v466 = vpop.permute.xlu0 %465
    %v468 = vmul.f32 %v461, %v466
    %470 = vrot.lane.b32.xlu0 %v468, 32
    %v471 = vpop.permute.xlu0 %470
    %v473 = vadd.f32 %v463, %v471
    %v474 = vtanh.pop %v473
    %476 = vrot.lane.b32.xlu0 %v474, 32
    %v477 = vpop.permute.xlu0 %476
    %v479 = vmul.f32 %v461, %v477
    %v480 = vperm.slane %v441, 0
    %v481 = vxor.u32 %v480, 2147483648
    %v482 = vmul.f32 %v481, 1.442695
    %v483 = vpow.pop %v482
    %v484 = vadd.f32 %v483, 1.0
    %v485 = vrcp.pop %v484
    %v486 = vmul.f32 %v484, %v485
    %v487 = vsub.f32 1.0, %v486
    %v488 = vmul.f32 %v485, %v487
    %v489 = vadd.f32 %v485, %v488
    %vm490 = vweird.f32 %v484
    %vm491 = vweird.f32 %v485
    %vm492 = vmor %vm490, %vm491
    %v493 = vsel %vm492, %v485, %v489
    %v494 = vand.u32 2147483647, %v484
    %vm495 = vcmp.eq.f32.partialorder %v494, 8.507059e+37
    %v496 = vand.u32 %v484, 2147483648
    %v497 = vor.u32 1.1754944e-38, %v496
    %v498 = vsel %vm495, %v497, %v493
    %v499 = vmul.f32 1.0, %v498
    %v500 = vtanh.pop %v480
    %v501 = vmul.f32 %v499, 0.0
    %503 = vrot.lane.b32.xlu0 %v500, 32
    %v504 = vpop.permute.xlu0 %503
    %v506 = vmul.f32 %v499, %v504
    %508 = vrot.lane.b32.xlu0 %v506, 32
    %v509 = vpop.permute.xlu0 %508
    %v511 = vadd.f32 %v501, %v509
    %v512 = vtanh.pop %v511
    %514 = vrot.lane.b32.xlu0 %v512, 32
    %v515 = vpop.permute.xlu0 %514
    %v517 = vmul.f32 %v499, %v515
    %v519 = vrot.slane %v479, 1
    %v520 = vperm.slane %v479, 0
    %v521 = vperm.slane %v519, 0
    %522 = vrot.lane.b32.xlu0 %v520, 64
    %v523 = vpop.permute.xlu0 %522
    %524 = vrot.lane.b32.xlu0 %v521, 64
    %v525 = vpop.permute.xlu0 %524
    %vm528 = vcmask 253952
    %529 = vst.msk [vmem:[#allocation2] sm:$0x1] %vm528, %v523
    %530 = vst.msk [vmem:[#allocation2 + $0x8] sm:$0x1] %vm528, %v525
    %v532 = vrot.slane %v517, 1
    %v533 = vperm.slane %v517, 0
    %v534 = vperm.slane %v532, 0
    %535 = vrot.lane.b32.xlu0 %v533, 96
    %v536 = vpop.permute.xlu0 %535
    %537 = vrot.lane.b32.xlu0 %v534, 96
    %v538 = vpop.permute.xlu0 %537
    %vm541 = vcmask 516352
    %542 = vst.msk [vmem:[#allocation2 + $0x7] sm:$0x1] %vm541, %v536
    %543 = vst.msk [vmem:[#allocation2 + $0xf] sm:$0x1] %vm541, %v538
    %544 = vrot.lane.b32.xlu0 %v479, 64
    %v545 = vpop.permute.xlu0 %544
    %547 = vrot.lane.b32.xlu0 %v517, 96
    %v548 = vpop.permute.xlu0 %547
    %vm550 = vcmask 261120
    %v551 = vsel %vm550, %v545, %v548
    %vm552 = vcmask 523264
    %v554 = vsel %vm552, %v551, 0
    %556 = vmatpush.msra.mxu0 0.0
    %557 = vmatpush.msra.mxu0 0.0
    %558 = vmatpush.msra.mxu0 0.0
    %559 = vmatpush.msra.mxu0 0.0
    %560 = vmatpush.msra.mxu0 0.0
    %561 = vmatpush.msra.mxu0 0.0
    %562 = vmatpush.msra.mxu0 0.0
    %563 = vmatpush.msra.mxu0 0.0
    %564 = vmatpush.msra.mxu0 %v438
    %565 = vmatpush.msra.mxu0 %v436
    %566 = vmatpush.msra.mxu0 %v434
    %567 = vmatpush.msra.mxu0 %v432
    %568 = vmatpush.msra.mxu0 %v430
    %569 = vmatpush.msra.mxu0 %v428
    %570 = vmatpush.msra.mxu0 %v426
    %571 = vmatpush.msra.mxu0 %v424
    %572 = vmatmul.f32.gmra.mxu0 %v554
    %v573 = vpop.f32.mrf.mxu0
    %v574 = vadd.f32 0.0, %v573
    %575 = vdwg.mxu0
    %576 = vmatpush.msra.mxu0 0.0
    %577 = vmatpush.msra.mxu0 0.0
    %578 = vmatpush.msra.mxu0 0.0
    %579 = vmatpush.msra.mxu0 0.0
    %580 = vmatpush.msra.mxu0 0.0
    %581 = vmatpush.msra.mxu0 0.0
    %582 = vmatpush.msra.mxu0 0.0
    %583 = vmatpush.msra.mxu0 0.0
    %584 = vmatpush.msra.mxu0 %v439
    %585 = vmatpush.msra.mxu0 %v437
    %586 = vmatpush.msra.mxu0 %v435
    %587 = vmatpush.msra.mxu0 %v433
    %588 = vmatpush.msra.mxu0 %v431
    %589 = vmatpush.msra.mxu0 %v429
    %590 = vmatpush.msra.mxu0 %v427
    %591 = vmatpush.msra.mxu0 %v425
    %592 = vmatmul.f32.gmra.mxu0 %v554
    %v593 = vpop.f32.mrf.mxu0
    %v594 = vadd.f32 0.0, %v593
    %595 = vdwg.mxu0
    %v598 = vrot.slane %v399, 7
    %v599 = vsel %vm274, %v598, %v396
    %v601 = vadd.f32 %v574, %v599
    %v602 = vadd.f32 %v601, %v442
    %v605 = vrot.slane %v419, 7
    %v606 = vrot.slane %v422, 6
    %v607 = vsel %vm274, %v606, %v605
    %v609 = vadd.f32 %v594, %v607
    %v610 = vadd.f32 %v609, %v480
    %v611 = vxor.u32 %v602, 2147483648
    %v612 = vmul.f32 %v611, 1.442695
    %v613 = vpow.pop %v612
    %v614 = vadd.f32 %v613, 1.0
    %v615 = vrcp.pop %v614
    %v616 = vmul.f32 %v614, %v615
    %v617 = vsub.f32 1.0, %v616
    %v618 = vmul.f32 %v615, %v617
    %v619 = vadd.f32 %v615, %v618
    %vm620 = vweird.f32 %v614
    %vm621 = vweird.f32 %v615
    %vm622 = vmor %vm620, %vm621
    %v623 = vsel %vm622, %v615, %v619
    %v624 = vand.u32 2147483647, %v614
    %vm625 = vcmp.eq.f32.partialorder %v624, 8.507059e+37
    %v626 = vand.u32 %v614, 2147483648
    %v627 = vor.u32 1.1754944e-38, %v626
    %v628 = vsel %vm625, %v627, %v623
    %v629 = vmul.f32 1.0, %v628
    %v630 = vtanh.pop %v602
    %v631 = vmul.f32 %v629, %v473
    %633 = vrot.lane.b32.xlu0 %v630, 32
    %v634 = vpop.permute.xlu0 %633
    %v636 = vmul.f32 %v629, %v634
    %638 = vrot.lane.b32.xlu0 %v636, 32
    %v639 = vpop.permute.xlu0 %638
    %v641 = vadd.f32 %v631, %v639
    %v642 = vtanh.pop %v641
    %644 = vrot.lane.b32.xlu0 %v642, 32
    %v645 = vpop.permute.xlu0 %644
    %v647 = vmul.f32 %v629, %v645
    %v648 = vxor.u32 %v610, 2147483648
    %v649 = vmul.f32 %v648, 1.442695
    %v650 = vpow.pop %v649
    %v651 = vadd.f32 %v650, 1.0
    %v652 = vrcp.pop %v651
    %v653 = vmul.f32 %v651, %v652
    %v654 = vsub.f32 1.0, %v653
    %v655 = vmul.f32 %v652, %v654
    %v656 = vadd.f32 %v652, %v655
    %vm657 = vweird.f32 %v651
    %vm658 = vweird.f32 %v652
    %vm659 = vmor %vm657, %vm658
    %v660 = vsel %vm659, %v652, %v656
    %v661 = vand.u32 2147483647, %v651
    %vm662 = vcmp.eq.f32.partialorder %v661, 8.507059e+37
    %v663 = vand.u32 %v651, 2147483648
    %v664 = vor.u32 1.1754944e-38, %v663
    %v665 = vsel %vm662, %v664, %v660
    %v666 = vmul.f32 1.0, %v665
    %v667 = vtanh.pop %v610
    %v668 = vmul.f32 %v666, %v511
    %670 = vrot.lane.b32.xlu0 %v667, 32
    %v671 = vpop.permute.xlu0 %670
    %v673 = vmul.f32 %v666, %v671
    %675 = vrot.lane.b32.xlu0 %v673, 32
    %v676 = vpop.permute.xlu0 %675
    %v678 = vadd.f32 %v668, %v676
    %v679 = vtanh.pop %v678
    %681 = vrot.lane.b32.xlu0 %v679, 32
    %v682 = vpop.permute.xlu0 %681
    %v684 = vmul.f32 %v666, %v682
    %v686 = vrot.slane %v647, 1
    %v687 = vperm.slane %v647, 0
    %v688 = vperm.slane %v686, 0
    %689 = vrot.lane.b32.xlu0 %v687, 64
    %v690 = vpop.permute.xlu0 %689
    %691 = vrot.lane.b32.xlu0 %v688, 64
    %v692 = vpop.permute.xlu0 %691
    %695 = vst.msk [vmem:[#allocation2 + $0x1] sm:$0x1] %vm528, %v690
    %696 = vst.msk [vmem:[#allocation2 + $0x9] sm:$0x1] %vm528, %v692
    %v698 = vrot.slane %v684, 1
    %v699 = vperm.slane %v684, 0
    %v700 = vperm.slane %v698, 0
    %701 = vrot.lane.b32.xlu0 %v699, 96
    %v702 = vpop.permute.xlu0 %701
    %703 = vrot.lane.b32.xlu0 %v700, 96
    %v704 = vpop.permute.xlu0 %703
    %707 = vst.msk [vmem:[#allocation2 + $0x6] sm:$0x1] %vm541, %v702
    %708 = vst.msk [vmem:[#allocation2 + $0xe] sm:$0x1] %vm541, %v704
    %709 = vrot.lane.b32.xlu0 %v647, 64
    %v710 = vpop.permute.xlu0 %709
    %712 = vrot.lane.b32.xlu0 %v684, 96
    %v713 = vpop.permute.xlu0 %712
    %v715 = vsel %vm550, %v710, %v713
    %v717 = vsel %vm552, %v715, 0
    %719 = vmatpush.msra.mxu0 0.0
    %720 = vmatpush.msra.mxu0 0.0
    %721 = vmatpush.msra.mxu0 0.0
    %722 = vmatpush.msra.mxu0 0.0
    %723 = vmatpush.msra.mxu0 0.0
    %724 = vmatpush.msra.mxu0 0.0
    %725 = vmatpush.msra.mxu0 0.0
    %726 = vmatpush.msra.mxu0 0.0
    %727 = vmatpush.msra.mxu0 %v438
    %728 = vmatpush.msra.mxu0 %v436
    %729 = vmatpush.msra.mxu0 %v434
    %730 = vmatpush.msra.mxu0 %v432
    %731 = vmatpush.msra.mxu0 %v430
    %732 = vmatpush.msra.mxu0 %v428
    %733 = vmatpush.msra.mxu0 %v426
    %734 = vmatpush.msra.mxu0 %v424
    %735 = vmatmul.f32.gmra.mxu0 %v717
    %v736 = vpop.f32.mrf.mxu0
    %v737 = vadd.f32 0.0, %v736
    %738 = vdwg.mxu0
    %739 = vmatpush.msra.mxu0 0.0
    %740 = vmatpush.msra.mxu0 0.0
    %741 = vmatpush.msra.mxu0 0.0
    %742 = vmatpush.msra.mxu0 0.0
    %743 = vmatpush.msra.mxu0 0.0
    %744 = vmatpush.msra.mxu0 0.0
    %745 = vmatpush.msra.mxu0 0.0
    %746 = vmatpush.msra.mxu0 0.0
    %747 = vmatpush.msra.mxu0 %v439
    %748 = vmatpush.msra.mxu0 %v437
    %749 = vmatpush.msra.mxu0 %v435
    %750 = vmatpush.msra.mxu0 %v433
    %751 = vmatpush.msra.mxu0 %v431
    %752 = vmatpush.msra.mxu0 %v429
    %753 = vmatpush.msra.mxu0 %v427
    %754 = vmatpush.msra.mxu0 %v425
    %755 = vmatmul.f32.gmra.mxu0 %v717
    %v756 = vpop.f32.mrf.mxu0
    %v757 = vadd.f32 0.0, %v756
    %758 = vdwg.mxu0
    %v759 = vrot.slane %v396, 1
    %v760 = vsel %vm274, %v399, %v759
    %v762 = vadd.f32 %v737, %v760
    %v763 = vadd.f32 %v762, %v442
    %v764 = vrot.slane %v419, 6
    %v765 = vrot.slane %v422, 5
    %v766 = vsel %vm274, %v765, %v764
    %v768 = vadd.f32 %v757, %v766
    %v769 = vadd.f32 %v768, %v480
    %v770 = vxor.u32 %v763, 2147483648
    %v771 = vmul.f32 %v770, 1.442695
    %v772 = vpow.pop %v771
    %v773 = vadd.f32 %v772, 1.0
    %v774 = vrcp.pop %v773
    %v775 = vmul.f32 %v773, %v774
    %v776 = vsub.f32 1.0, %v775
    %v777 = vmul.f32 %v774, %v776
    %v778 = vadd.f32 %v774, %v777
    %vm779 = vweird.f32 %v773
    %vm780 = vweird.f32 %v774
    %vm781 = vmor %vm779, %vm780
    %v782 = vsel %vm781, %v774, %v778
    %v783 = vand.u32 2147483647, %v773
    %vm784 = vcmp.eq.f32.partialorder %v783, 8.507059e+37
    %v785 = vand.u32 %v773, 2147483648
    %v786 = vor.u32 1.1754944e-38, %v785
    %v787 = vsel %vm784, %v786, %v782
    %v788 = vmul.f32 1.0, %v787
    %v789 = vtanh.pop %v763
    %v790 = vmul.f32 %v788, %v641
    %792 = vrot.lane.b32.xlu0 %v789, 32
    %v793 = vpop.permute.xlu0 %792
    %v795 = vmul.f32 %v788, %v793
    %797 = vrot.lane.b32.xlu0 %v795, 32
    %v798 = vpop.permute.xlu0 %797
    %v800 = vadd.f32 %v790, %v798
    %v801 = vtanh.pop %v800
    %803 = vrot.lane.b32.xlu0 %v801, 32
    %v804 = vpop.permute.xlu0 %803
    %v806 = vmul.f32 %v788, %v804
    %v807 = vxor.u32 %v769, 2147483648
    %v808 = vmul.f32 %v807, 1.442695
    %v809 = vpow.pop %v808
    %v810 = vadd.f32 %v809, 1.0
    %v811 = vrcp.pop %v810
    %v812 = vmul.f32 %v810, %v811
    %v813 = vsub.f32 1.0, %v812
    %v814 = vmul.f32 %v811, %v813
    %v815 = vadd.f32 %v811, %v814
    %vm816 = vweird.f32 %v810
    %vm817 = vweird.f32 %v811
    %vm818 = vmor %vm816, %vm817
    %v819 = vsel %vm818, %v811, %v815
    %v820 = vand.u32 2147483647, %v810
    %vm821 = vcmp.eq.f32.partialorder %v820, 8.507059e+37
    %v822 = vand.u32 %v810, 2147483648
    %v823 = vor.u32 1.1754944e-38, %v822
    %v824 = vsel %vm821, %v823, %v819
    %v825 = vmul.f32 1.0, %v824
    %v826 = vtanh.pop %v769
    %v827 = vmul.f32 %v825, %v678
    %829 = vrot.lane.b32.xlu0 %v826, 32
    %v830 = vpop.permute.xlu0 %829
    %v832 = vmul.f32 %v825, %v830
    %834 = vrot.lane.b32.xlu0 %v832, 32
    %v835 = vpop.permute.xlu0 %834
    %v837 = vadd.f32 %v827, %v835
    %v838 = vtanh.pop %v837
    %840 = vrot.lane.b32.xlu0 %v838, 32
    %v841 = vpop.permute.xlu0 %840
    %v843 = vmul.f32 %v825, %v841
    %v845 = vrot.slane %v806, 1
    %v846 = vperm.slane %v806, 0
    %v847 = vperm.slane %v845, 0
    %848 = vrot.lane.b32.xlu0 %v846, 64
    %v849 = vpop.permute.xlu0 %848
    %850 = vrot.lane.b32.xlu0 %v847, 64
    %v851 = vpop.permute.xlu0 %850
    %854 = vst.msk [vmem:[#allocation2 + $0x2] sm:$0x1] %vm528, %v849
    %855 = vst.msk [vmem:[#allocation2 + $0xa] sm:$0x1] %vm528, %v851
    %v857 = vrot.slane %v843, 1
    %v858 = vperm.slane %v843, 0
    %v859 = vperm.slane %v857, 0
    %860 = vrot.lane.b32.xlu0 %v858, 96
    %v861 = vpop.permute.xlu0 %860
    %862 = vrot.lane.b32.xlu0 %v859, 96
    %v863 = vpop.permute.xlu0 %862
    %866 = vst.msk [vmem:[#allocation2 + $0x5] sm:$0x1] %vm541, %v861
    %867 = vst.msk [vmem:[#allocation2 + $0xd] sm:$0x1] %vm541, %v863
    %868 = vrot.lane.b32.xlu0 %v806, 64
    %v869 = vpop.permute.xlu0 %868
    %871 = vrot.lane.b32.xlu0 %v843, 96
    %v872 = vpop.permute.xlu0 %871
    %v874 = vsel %vm550, %v869, %v872
    %v876 = vsel %vm552, %v874, 0
    %878 = vmatpush.msra.mxu0 0.0
    %879 = vmatpush.msra.mxu0 0.0
    %880 = vmatpush.msra.mxu0 0.0
    %881 = vmatpush.msra.mxu0 0.0
    %882 = vmatpush.msra.mxu0 0.0
    %883 = vmatpush.msra.mxu0 0.0
    %884 = vmatpush.msra.mxu0 0.0
    %885 = vmatpush.msra.mxu0 0.0
    %886 = vmatpush.msra.mxu0 %v438
    %887 = vmatpush.msra.mxu0 %v436
    %888 = vmatpush.msra.mxu0 %v434
    %889 = vmatpush.msra.mxu0 %v432
    %890 = vmatpush.msra.mxu0 %v430
    %891 = vmatpush.msra.mxu0 %v428
    %892 = vmatpush.msra.mxu0 %v426
    %893 = vmatpush.msra.mxu0 %v424
    %894 = vmatmul.f32.gmra.mxu0 %v876
    %v895 = vpop.f32.mrf.mxu0
    %v896 = vadd.f32 0.0, %v895
    %897 = vdwg.mxu0
    %898 = vmatpush.msra.mxu0 0.0
    %899 = vmatpush.msra.mxu0 0.0
    %900 = vmatpush.msra.mxu0 0.0
    %901 = vmatpush.msra.mxu0 0.0
    %902 = vmatpush.msra.mxu0 0.0
    %903 = vmatpush.msra.mxu0 0.0
    %904 = vmatpush.msra.mxu0 0.0
    %905 = vmatpush.msra.mxu0 0.0
    %906 = vmatpush.msra.mxu0 %v439
    %907 = vmatpush.msra.mxu0 %v437
    %908 = vmatpush.msra.mxu0 %v435
    %909 = vmatpush.msra.mxu0 %v433
    %910 = vmatpush.msra.mxu0 %v431
    %911 = vmatpush.msra.mxu0 %v429
    %912 = vmatpush.msra.mxu0 %v427
    %913 = vmatpush.msra.mxu0 %v425
    %914 = vmatmul.f32.gmra.mxu0 %v876
    %v915 = vpop.f32.mrf.mxu0
    %v916 = vadd.f32 0.0, %v915
    %917 = vdwg.mxu0
    %v918 = vrot.slane %v396, 2
    %v919 = vrot.slane %v399, 1
    %v920 = vsel %vm274, %v919, %v918
    %v922 = vadd.f32 %v896, %v920
    %v923 = vadd.f32 %v922, %v442
    %v924 = vrot.slane %v419, 5
    %v925 = vrot.slane %v422, 4
    %v926 = vsel %vm274, %v925, %v924
    %v928 = vadd.f32 %v916, %v926
    %v929 = vadd.f32 %v928, %v480
    %v930 = vxor.u32 %v923, 2147483648
    %v931 = vmul.f32 %v930, 1.442695
    %v932 = vpow.pop %v931
    %v933 = vadd.f32 %v932, 1.0
    %v934 = vrcp.pop %v933
    %v935 = vmul.f32 %v933, %v934
    %v936 = vsub.f32 1.0, %v935
    %v937 = vmul.f32 %v934, %v936
    %v938 = vadd.f32 %v934, %v937
    %vm939 = vweird.f32 %v933
    %vm940 = vweird.f32 %v934
    %vm941 = vmor %vm939, %vm940
    %v942 = vsel %vm941, %v934, %v938
    %v943 = vand.u32 2147483647, %v933
    %vm944 = vcmp.eq.f32.partialorder %v943, 8.507059e+37
    %v945 = vand.u32 %v933, 2147483648
    %v946 = vor.u32 1.1754944e-38, %v945
    %v947 = vsel %vm944, %v946, %v942
    %v948 = vmul.f32 1.0, %v947
    %v949 = vtanh.pop %v923
    %v950 = vmul.f32 %v948, %v800
    %952 = vrot.lane.b32.xlu0 %v949, 32
    %v953 = vpop.permute.xlu0 %952
    %v955 = vmul.f32 %v948, %v953
    %957 = vrot.lane.b32.xlu0 %v955, 32
    %v958 = vpop.permute.xlu0 %957
    %v960 = vadd.f32 %v950, %v958
    %v961 = vtanh.pop %v960
    %963 = vrot.lane.b32.xlu0 %v961, 32
    %v964 = vpop.permute.xlu0 %963
    %v966 = vmul.f32 %v948, %v964
    %v967 = vxor.u32 %v929, 2147483648
    %v968 = vmul.f32 %v967, 1.442695
    %v969 = vpow.pop %v968
    %v970 = vadd.f32 %v969, 1.0
    %v971 = vrcp.pop %v970
    %v972 = vmul.f32 %v970, %v971
    %v973 = vsub.f32 1.0, %v972
    %v974 = vmul.f32 %v971, %v973
    %v975 = vadd.f32 %v971, %v974
    %vm976 = vweird.f32 %v970
    %vm977 = vweird.f32 %v971
    %vm978 = vmor %vm976, %vm977
    %v979 = vsel %vm978, %v971, %v975
    %v980 = vand.u32 2147483647, %v970
    %vm981 = vcmp.eq.f32.partialorder %v980, 8.507059e+37
    %v982 = vand.u32 %v970, 2147483648
    %v983 = vor.u32 1.1754944e-38, %v982
    %v984 = vsel %vm981, %v983, %v979
    %v985 = vmul.f32 1.0, %v984
    %v986 = vtanh.pop %v929
    %v987 = vmul.f32 %v985, %v837
    %989 = vrot.lane.b32.xlu0 %v986, 32
    %v990 = vpop.permute.xlu0 %989
    %v992 = vmul.f32 %v985, %v990
    %994 = vrot.lane.b32.xlu0 %v992, 32
    %v995 = vpop.permute.xlu0 %994
    %v997 = vadd.f32 %v987, %v995
    %v998 = vtanh.pop %v997
    %1000 = vrot.lane.b32.xlu0 %v998, 32
    %v1001 = vpop.permute.xlu0 %1000
    %v1003 = vmul.f32 %v985, %v1001
    %v1005 = vrot.slane %v966, 1
    %v1006 = vperm.slane %v966, 0
    %v1007 = vperm.slane %v1005, 0
    %1008 = vrot.lane.b32.xlu0 %v1006, 64
    %v1009 = vpop.permute.xlu0 %1008
    %1010 = vrot.lane.b32.xlu0 %v1007, 64
    %v1011 = vpop.permute.xlu0 %1010
    %1014 = vst.msk [vmem:[#allocation2 + $0x3] sm:$0x1] %vm528, %v1009
    %1015 = vst.msk [vmem:[#allocation2 + $0xb] sm:$0x1] %vm528, %v1011
    %v1017 = vrot.slane %v1003, 1
    %v1018 = vperm.slane %v1003, 0
    %v1019 = vperm.slane %v1017, 0
    %1020 = vrot.lane.b32.xlu0 %v1018, 96
    %v1021 = vpop.permute.xlu0 %1020
    %1022 = vrot.lane.b32.xlu0 %v1019, 96
    %v1023 = vpop.permute.xlu0 %1022
    %1026 = vst.msk [vmem:[#allocation2 + $0x4] sm:$0x1] %vm541, %v1021
    %1027 = vst.msk [vmem:[#allocation2 + $0xc] sm:$0x1] %vm541, %v1023
    %1028 = vrot.lane.b32.xlu0 %v966, 64
    %v1029 = vpop.permute.xlu0 %1028
    %1031 = vrot.lane.b32.xlu0 %v1003, 96
    %v1032 = vpop.permute.xlu0 %1031
    %v1034 = vsel %vm550, %v1029, %v1032
    %v1036 = vsel %vm552, %v1034, 0
    %1038 = vmatpush.msra.mxu0 0.0
    %1039 = vmatpush.msra.mxu0 0.0
    %1040 = vmatpush.msra.mxu0 0.0
    %1041 = vmatpush.msra.mxu0 0.0
    %1042 = vmatpush.msra.mxu0 0.0
    %1043 = vmatpush.msra.mxu0 0.0
    %1044 = vmatpush.msra.mxu0 0.0
    %1045 = vmatpush.msra.mxu0 0.0
    %1046 = vmatpush.msra.mxu0 %v438
    %1047 = vmatpush.msra.mxu0 %v436
    %1048 = vmatpush.msra.mxu0 %v434
    %1049 = vmatpush.msra.mxu0 %v432
    %1050 = vmatpush.msra.mxu0 %v430
    %1051 = vmatpush.msra.mxu0 %v428
    %1052 = vmatpush.msra.mxu0 %v426
    %1053 = vmatpush.msra.mxu0 %v424
    %1054 = vmatmul.f32.gmra.mxu0 %v1036
    %v1055 = vpop.f32.mrf.mxu0
    %v1056 = vadd.f32 0.0, %v1055
    %1057 = vdwg.mxu0
    %1058 = vmatpush.msra.mxu0 0.0
    %1059 = vmatpush.msra.mxu0 0.0
    %1060 = vmatpush.msra.mxu0 0.0
    %1061 = vmatpush.msra.mxu0 0.0
    %1062 = vmatpush.msra.mxu0 0.0
    %1063 = vmatpush.msra.mxu0 0.0
    %1064 = vmatpush.msra.mxu0 0.0
    %1065 = vmatpush.msra.mxu0 0.0
    %1066 = vmatpush.msra.mxu0 %v439
    %1067 = vmatpush.msra.mxu0 %v437
    %1068 = vmatpush.msra.mxu0 %v435
    %1069 = vmatpush.msra.mxu0 %v433
    %1070 = vmatpush.msra.mxu0 %v431
    %1071 = vmatpush.msra.mxu0 %v429
    %1072 = vmatpush.msra.mxu0 %v427
    %1073 = vmatpush.msra.mxu0 %v425
    %1074 = vmatmul.f32.gmra.mxu0 %v1036
    %v1075 = vpop.f32.mrf.mxu0
    %v1076 = vadd.f32 0.0, %v1075
    %1077 = vdwg.mxu0
    %v1078 = vrot.slane %v396, 3
    %v1079 = vrot.slane %v399, 2
    %v1080 = vsel %vm274, %v1079, %v1078
    %v1082 = vadd.f32 %v1056, %v1080
    %v1083 = vadd.f32 %v1082, %v442
    %v1084 = vrot.slane %v419, 4
    %v1085 = vrot.slane %v422, 3
    %v1086 = vsel %vm274, %v1085, %v1084
    %v1088 = vadd.f32 %v1076, %v1086
    %v1089 = vadd.f32 %v1088, %v480
    %v1090 = vxor.u32 %v1083, 2147483648
    %v1091 = vmul.f32 %v1090, 1.442695
    %v1092 = vpow.pop %v1091
    %v1093 = vadd.f32 %v1092, 1.0
    %v1094 = vrcp.pop %v1093
    %v1095 = vmul.f32 %v1093, %v1094
    %v1096 = vsub.f32 1.0, %v1095
    %v1097 = vmul.f32 %v1094, %v1096
    %v1098 = vadd.f32 %v1094, %v1097
    %vm1099 = vweird.f32 %v1093
    %vm1100 = vweird.f32 %v1094
    %vm1101 = vmor %vm1099, %vm1100
    %v1102 = vsel %vm1101, %v1094, %v1098
    %v1103 = vand.u32 2147483647, %v1093
    %vm1104 = vcmp.eq.f32.partialorder %v1103, 8.507059e+37
    %v1105 = vand.u32 %v1093, 2147483648
    %v1106 = vor.u32 1.1754944e-38, %v1105
    %v1107 = vsel %vm1104, %v1106, %v1102
    %v1108 = vmul.f32 1.0, %v1107
    %v1109 = vtanh.pop %v1083
    %v1110 = vmul.f32 %v1108, %v960
    %1112 = vrot.lane.b32.xlu0 %v1109, 32
    %v1113 = vpop.permute.xlu0 %1112
    %v1115 = vmul.f32 %v1108, %v1113
    %1117 = vrot.lane.b32.xlu0 %v1115, 32
    %v1118 = vpop.permute.xlu0 %1117
    %v1120 = vadd.f32 %v1110, %v1118
    %v1121 = vtanh.pop %v1120
    %1123 = vrot.lane.b32.xlu0 %v1121, 32
    %v1124 = vpop.permute.xlu0 %1123
    %v1126 = vmul.f32 %v1108, %v1124
    %v1127 = vxor.u32 %v1089, 2147483648
    %v1128 = vmul.f32 %v1127, 1.442695
    %v1129 = vpow.pop %v1128
    %v1130 = vadd.f32 %v1129, 1.0
    %v1131 = vrcp.pop %v1130
    %v1132 = vmul.f32 %v1130, %v1131
    %v1133 = vsub.f32 1.0, %v1132
    %v1134 = vmul.f32 %v1131, %v1133
    %v1135 = vadd.f32 %v1131, %v1134
    %vm1136 = vweird.f32 %v1130
    %vm1137 = vweird.f32 %v1131
    %vm1138 = vmor %vm1136, %vm1137
    %v1139 = vsel %vm1138, %v1131, %v1135
    %v1140 = vand.u32 2147483647, %v1130
    %vm1141 = vcmp.eq.f32.partialorder %v1140, 8.507059e+37
    %v1142 = vand.u32 %v1130, 2147483648
    %v1143 = vor.u32 1.1754944e-38, %v1142
    %v1144 = vsel %vm1141, %v1143, %v1139
    %v1145 = vmul.f32 1.0, %v1144
    %v1146 = vtanh.pop %v1089
    %v1147 = vmul.f32 %v1145, %v997
    %1149 = vrot.lane.b32.xlu0 %v1146, 32
    %v1150 = vpop.permute.xlu0 %1149
    %v1152 = vmul.f32 %v1145, %v1150
    %1154 = vrot.lane.b32.xlu0 %v1152, 32
    %v1155 = vpop.permute.xlu0 %1154
    %v1157 = vadd.f32 %v1147, %v1155
    %v1158 = vtanh.pop %v1157
    %1160 = vrot.lane.b32.xlu0 %v1158, 32
    %v1161 = vpop.permute.xlu0 %1160
    %v1163 = vmul.f32 %v1145, %v1161
    %v1165 = vrot.slane %v1126, 1
    %v1166 = vperm.slane %v1126, 0
    %v1167 = vperm.slane %v1165, 0
    %1168 = vrot.lane.b32.xlu0 %v1166, 64
    %v1169 = vpop.permute.xlu0 %1168
    %1170 = vrot.lane.b32.xlu0 %v1167, 64
    %v1171 = vpop.permute.xlu0 %1170
    %1174 = vst.msk [vmem:[#allocation2 + $0x4] sm:$0x1] %vm528, %v1169
    %1175 = vst.msk [vmem:[#allocation2 + $0xc] sm:$0x1] %vm528, %v1171
    %v1177 = vrot.slane %v1163, 1
    %v1178 = vperm.slane %v1163, 0
    %v1179 = vperm.slane %v1177, 0
    %1180 = vrot.lane.b32.xlu0 %v1178, 96
    %v1181 = vpop.permute.xlu0 %1180
    %1182 = vrot.lane.b32.xlu0 %v1179, 96
    %v1183 = vpop.permute.xlu0 %1182
    %1186 = vst.msk [vmem:[#allocation2 + $0x3] sm:$0x1] %vm541, %v1181
    %1187 = vst.msk [vmem:[#allocation2 + $0xb] sm:$0x1] %vm541, %v1183
    %1188 = vrot.lane.b32.xlu0 %v1126, 64
    %v1189 = vpop.permute.xlu0 %1188
    %1191 = vrot.lane.b32.xlu0 %v1163, 96
    %v1192 = vpop.permute.xlu0 %1191
    %v1194 = vsel %vm550, %v1189, %v1192
    %v1196 = vsel %vm552, %v1194, 0
    %1198 = vmatpush.msra.mxu0 0.0
    %1199 = vmatpush.msra.mxu0 0.0
    %1200 = vmatpush.msra.mxu0 0.0
    %1201 = vmatpush.msra.mxu0 0.0
    %1202 = vmatpush.msra.mxu0 0.0
    %1203 = vmatpush.msra.mxu0 0.0
    %1204 = vmatpush.msra.mxu0 0.0
    %1205 = vmatpush.msra.mxu0 0.0
    %1206 = vmatpush.msra.mxu0 %v438
    %1207 = vmatpush.msra.mxu0 %v436
    %1208 = vmatpush.msra.mxu0 %v434
    %1209 = vmatpush.msra.mxu0 %v432
    %1210 = vmatpush.msra.mxu0 %v430
    %1211 = vmatpush.msra.mxu0 %v428
    %1212 = vmatpush.msra.mxu0 %v426
    %1213 = vmatpush.msra.mxu0 %v424
    %1214 = vmatmul.f32.gmra.mxu0 %v1196
    %v1215 = vpop.f32.mrf.mxu0
    %v1216 = vadd.f32 0.0, %v1215
    %1217 = vdwg.mxu0
    %1218 = vmatpush.msra.mxu0 0.0
    %1219 = vmatpush.msra.mxu0 0.0
    %1220 = vmatpush.msra.mxu0 0.0
    %1221 = vmatpush.msra.mxu0 0.0
    %1222 = vmatpush.msra.mxu0 0.0
    %1223 = vmatpush.msra.mxu0 0.0
    %1224 = vmatpush.msra.mxu0 0.0
    %1225 = vmatpush.msra.mxu0 0.0
    %1226 = vmatpush.msra.mxu0 %v439
    %1227 = vmatpush.msra.mxu0 %v437
    %1228 = vmatpush.msra.mxu0 %v435
    %1229 = vmatpush.msra.mxu0 %v433
    %1230 = vmatpush.msra.mxu0 %v431
    %1231 = vmatpush.msra.mxu0 %v429
    %1232 = vmatpush.msra.mxu0 %v427
    %1233 = vmatpush.msra.mxu0 %v425
    %1234 = vmatmul.f32.gmra.mxu0 %v1196
    %v1235 = vpop.f32.mrf.mxu0
    %v1236 = vadd.f32 0.0, %v1235
    %1237 = vdwg.mxu0
    %v1238 = vrot.slane %v396, 4
    %v1239 = vrot.slane %v399, 3
    %v1240 = vsel %vm274, %v1239, %v1238
    %v1242 = vadd.f32 %v1216, %v1240
    %v1243 = vadd.f32 %v1242, %v442
    %v1244 = vrot.slane %v419, 3
    %v1245 = vrot.slane %v422, 2
    %v1246 = vsel %vm274, %v1245, %v1244
    %v1248 = vadd.f32 %v1236, %v1246
    %v1249 = vadd.f32 %v1248, %v480
    %v1250 = vxor.u32 %v1243, 2147483648
    %v1251 = vmul.f32 %v1250, 1.442695
    %v1252 = vpow.pop %v1251
    %v1253 = vadd.f32 %v1252, 1.0
    %v1254 = vrcp.pop %v1253
    %v1255 = vmul.f32 %v1253, %v1254
    %v1256 = vsub.f32 1.0, %v1255
    %v1257 = vmul.f32 %v1254, %v1256
    %v1258 = vadd.f32 %v1254, %v1257
    %vm1259 = vweird.f32 %v1253
    %vm1260 = vweird.f32 %v1254
    %vm1261 = vmor %vm1259, %vm1260
    %v1262 = vsel %vm1261, %v1254, %v1258
    %v1263 = vand.u32 2147483647, %v1253
    %vm1264 = vcmp.eq.f32.partialorder %v1263, 8.507059e+37
    %v1265 = vand.u32 %v1253, 2147483648
    %v1266 = vor.u32 1.1754944e-38, %v1265
    %v1267 = vsel %vm1264, %v1266, %v1262
    %v1268 = vmul.f32 1.0, %v1267
    %v1269 = vtanh.pop %v1243
    %v1270 = vmul.f32 %v1268, %v1120
    %1272 = vrot.lane.b32.xlu0 %v1269, 32
    %v1273 = vpop.permute.xlu0 %1272
    %v1275 = vmul.f32 %v1268, %v1273
    %1277 = vrot.lane.b32.xlu0 %v1275, 32
    %v1278 = vpop.permute.xlu0 %1277
    %v1280 = vadd.f32 %v1270, %v1278
    %v1281 = vtanh.pop %v1280
    %1283 = vrot.lane.b32.xlu0 %v1281, 32
    %v1284 = vpop.permute.xlu0 %1283
    %v1286 = vmul.f32 %v1268, %v1284
    %v1287 = vxor.u32 %v1249, 2147483648
    %v1288 = vmul.f32 %v1287, 1.442695
    %v1289 = vpow.pop %v1288
    %v1290 = vadd.f32 %v1289, 1.0
    %v1291 = vrcp.pop %v1290
    %v1292 = vmul.f32 %v1290, %v1291
    %v1293 = vsub.f32 1.0, %v1292
    %v1294 = vmul.f32 %v1291, %v1293
    %v1295 = vadd.f32 %v1291, %v1294
    %vm1296 = vweird.f32 %v1290
    %vm1297 = vweird.f32 %v1291
    %vm1298 = vmor %vm1296, %vm1297
    %v1299 = vsel %vm1298, %v1291, %v1295
    %v1300 = vand.u32 2147483647, %v1290
    %vm1301 = vcmp.eq.f32.partialorder %v1300, 8.507059e+37
    %v1302 = vand.u32 %v1290, 2147483648
    %v1303 = vor.u32 1.1754944e-38, %v1302
    %v1304 = vsel %vm1301, %v1303, %v1299
    %v1305 = vmul.f32 1.0, %v1304
    %v1306 = vtanh.pop %v1249
    %v1307 = vmul.f32 %v1305, %v1157
    %1309 = vrot.lane.b32.xlu0 %v1306, 32
    %v1310 = vpop.permute.xlu0 %1309
    %v1312 = vmul.f32 %v1305, %v1310
    %1314 = vrot.lane.b32.xlu0 %v1312, 32
    %v1315 = vpop.permute.xlu0 %1314
    %v1317 = vadd.f32 %v1307, %v1315
    %v1318 = vtanh.pop %v1317
    %1320 = vrot.lane.b32.xlu0 %v1318, 32
    %v1321 = vpop.permute.xlu0 %1320
    %v1323 = vmul.f32 %v1305, %v1321
    %v1325 = vrot.slane %v1286, 1
    %v1326 = vperm.slane %v1286, 0
    %v1327 = vperm.slane %v1325, 0
    %1328 = vrot.lane.b32.xlu0 %v1326, 64
    %v1329 = vpop.permute.xlu0 %1328
    %1330 = vrot.lane.b32.xlu0 %v1327, 64
    %v1331 = vpop.permute.xlu0 %1330
    %1334 = vst.msk [vmem:[#allocation2 + $0x5] sm:$0x1] %vm528, %v1329
    %1335 = vst.msk [vmem:[#allocation2 + $0xd] sm:$0x1] %vm528, %v1331
    %v1337 = vrot.slane %v1323, 1
    %v1338 = vperm.slane %v1323, 0
    %v1339 = vperm.slane %v1337, 0
    %1340 = vrot.lane.b32.xlu0 %v1338, 96
    %v1341 = vpop.permute.xlu0 %1340
    %1342 = vrot.lane.b32.xlu0 %v1339, 96
    %v1343 = vpop.permute.xlu0 %1342
    %1346 = vst.msk [vmem:[#allocation2 + $0x2] sm:$0x1] %vm541, %v1341
    %1347 = vst.msk [vmem:[#allocation2 + $0xa] sm:$0x1] %vm541, %v1343
    %1348 = vrot.lane.b32.xlu0 %v1286, 64
    %v1349 = vpop.permute.xlu0 %1348
    %1351 = vrot.lane.b32.xlu0 %v1323, 96
    %v1352 = vpop.permute.xlu0 %1351
    %v1354 = vsel %vm550, %v1349, %v1352
    %v1356 = vsel %vm552, %v1354, 0
    %1358 = vmatpush.msra.mxu0 0.0
    %1359 = vmatpush.msra.mxu0 0.0
    %1360 = vmatpush.msra.mxu0 0.0
    %1361 = vmatpush.msra.mxu0 0.0
    %1362 = vmatpush.msra.mxu0 0.0
    %1363 = vmatpush.msra.mxu0 0.0
    %1364 = vmatpush.msra.mxu0 0.0
    %1365 = vmatpush.msra.mxu0 0.0
    %1366 = vmatpush.msra.mxu0 %v438
    %1367 = vmatpush.msra.mxu0 %v436
    %1368 = vmatpush.msra.mxu0 %v434
    %1369 = vmatpush.msra.mxu0 %v432
    %1370 = vmatpush.msra.mxu0 %v430
    %1371 = vmatpush.msra.mxu0 %v428
    %1372 = vmatpush.msra.mxu0 %v426
    %1373 = vmatpush.msra.mxu0 %v424
    %1374 = vmatmul.f32.gmra.mxu0 %v1356
    %v1375 = vpop.f32.mrf.mxu0
    %v1376 = vadd.f32 0.0, %v1375
    %1377 = vdwg.mxu0
    %1378 = vmatpush.msra.mxu0 0.0
    %1379 = vmatpush.msra.mxu0 0.0
    %1380 = vmatpush.msra.mxu0 0.0
    %1381 = vmatpush.msra.mxu0 0.0
    %1382 = vmatpush.msra.mxu0 0.0
    %1383 = vmatpush.msra.mxu0 0.0
    %1384 = vmatpush.msra.mxu0 0.0
    %1385 = vmatpush.msra.mxu0 0.0
    %1386 = vmatpush.msra.mxu0 %v439
    %1387 = vmatpush.msra.mxu0 %v437
    %1388 = vmatpush.msra.mxu0 %v435
    %1389 = vmatpush.msra.mxu0 %v433
    %1390 = vmatpush.msra.mxu0 %v431
    %1391 = vmatpush.msra.mxu0 %v429
    %1392 = vmatpush.msra.mxu0 %v427
    %1393 = vmatpush.msra.mxu0 %v425
    %1394 = vmatmul.f32.gmra.mxu0 %v1356
    %v1395 = vpop.f32.mrf.mxu0
    %v1396 = vadd.f32 0.0, %v1395
    %1397 = vdwg.mxu0
    %v1398 = vrot.slane %v396, 5
    %v1399 = vrot.slane %v399, 4
    %v1400 = vsel %vm274, %v1399, %v1398
    %v1402 = vadd.f32 %v1376, %v1400
    %v1403 = vadd.f32 %v1402, %v442
    %v1404 = vrot.slane %v419, 2
    %v1405 = vrot.slane %v422, 1
    %v1406 = vsel %vm274, %v1405, %v1404
    %v1408 = vadd.f32 %v1396, %v1406
    %v1409 = vadd.f32 %v1408, %v480
    %v1410 = vxor.u32 %v1403, 2147483648
    %v1411 = vmul.f32 %v1410, 1.442695
    %v1412 = vpow.pop %v1411
    %v1413 = vadd.f32 %v1412, 1.0
    %v1414 = vrcp.pop %v1413
    %v1415 = vmul.f32 %v1413, %v1414
    %v1416 = vsub.f32 1.0, %v1415
    %v1417 = vmul.f32 %v1414, %v1416
    %v1418 = vadd.f32 %v1414, %v1417
    %vm1419 = vweird.f32 %v1413
    %vm1420 = vweird.f32 %v1414
    %vm1421 = vmor %vm1419, %vm1420
    %v1422 = vsel %vm1421, %v1414, %v1418
    %v1423 = vand.u32 2147483647, %v1413
    %vm1424 = vcmp.eq.f32.partialorder %v1423, 8.507059e+37
    %v1425 = vand.u32 %v1413, 2147483648
    %v1426 = vor.u32 1.1754944e-38, %v1425
    %v1427 = vsel %vm1424, %v1426, %v1422
    %v1428 = vmul.f32 1.0, %v1427
    %v1429 = vtanh.pop %v1403
    %v1430 = vmul.f32 %v1428, %v1280
    %1432 = vrot.lane.b32.xlu0 %v1429, 32
    %v1433 = vpop.permute.xlu0 %1432
    %v1435 = vmul.f32 %v1428, %v1433
    %1437 = vrot.lane.b32.xlu0 %v1435, 32
    %v1438 = vpop.permute.xlu0 %1437
    %v1440 = vadd.f32 %v1430, %v1438
    %v1441 = vtanh.pop %v1440
    %1443 = vrot.lane.b32.xlu0 %v1441, 32
    %v1444 = vpop.permute.xlu0 %1443
    %v1446 = vmul.f32 %v1428, %v1444
    %v1447 = vxor.u32 %v1409, 2147483648
    %v1448 = vmul.f32 %v1447, 1.442695
    %v1449 = vpow.pop %v1448
    %v1450 = vadd.f32 %v1449, 1.0
    %v1451 = vrcp.pop %v1450
    %v1452 = vmul.f32 %v1450, %v1451
    %v1453 = vsub.f32 1.0, %v1452
    %v1454 = vmul.f32 %v1451, %v1453
    %v1455 = vadd.f32 %v1451, %v1454
    %vm1456 = vweird.f32 %v1450
    %vm1457 = vweird.f32 %v1451
    %vm1458 = vmor %vm1456, %vm1457
    %v1459 = vsel %vm1458, %v1451, %v1455
    %v1460 = vand.u32 2147483647, %v1450
    %vm1461 = vcmp.eq.f32.partialorder %v1460, 8.507059e+37
    %v1462 = vand.u32 %v1450, 2147483648
    %v1463 = vor.u32 1.1754944e-38, %v1462
    %v1464 = vsel %vm1461, %v1463, %v1459
    %v1465 = vmul.f32 1.0, %v1464
    %v1466 = vtanh.pop %v1409
    %v1467 = vmul.f32 %v1465, %v1317
    %1469 = vrot.lane.b32.xlu0 %v1466, 32
    %v1470 = vpop.permute.xlu0 %1469
    %v1472 = vmul.f32 %v1465, %v1470
    %1474 = vrot.lane.b32.xlu0 %v1472, 32
    %v1475 = vpop.permute.xlu0 %1474
    %v1477 = vadd.f32 %v1467, %v1475
    %v1478 = vtanh.pop %v1477
    %1480 = vrot.lane.b32.xlu0 %v1478, 32
    %v1481 = vpop.permute.xlu0 %1480
    %v1483 = vmul.f32 %v1465, %v1481
    %v1485 = vrot.slane %v1446, 1
    %v1486 = vperm.slane %v1446, 0
    %v1487 = vperm.slane %v1485, 0
    %1488 = vrot.lane.b32.xlu0 %v1486, 64
    %v1489 = vpop.permute.xlu0 %1488
    %1490 = vrot.lane.b32.xlu0 %v1487, 64
    %v1491 = vpop.permute.xlu0 %1490
    %1494 = vst.msk [vmem:[#allocation2 + $0x6] sm:$0x1] %vm528, %v1489
    %1495 = vst.msk [vmem:[#allocation2 + $0xe] sm:$0x1] %vm528, %v1491
    %v1497 = vrot.slane %v1483, 1
    %v1498 = vperm.slane %v1483, 0
    %v1499 = vperm.slane %v1497, 0
    %1500 = vrot.lane.b32.xlu0 %v1498, 96
    %v1501 = vpop.permute.xlu0 %1500
    %1502 = vrot.lane.b32.xlu0 %v1499, 96
    %v1503 = vpop.permute.xlu0 %1502
    %1506 = vst.msk [vmem:[#allocation2 + $0x1] sm:$0x1] %vm541, %v1501
    %1507 = vst.msk [vmem:[#allocation2 + $0x9] sm:$0x1] %vm541, %v1503
    %1508 = vrot.lane.b32.xlu0 %v1446, 64
    %v1509 = vpop.permute.xlu0 %1508
    %1511 = vrot.lane.b32.xlu0 %v1483, 96
    %v1512 = vpop.permute.xlu0 %1511
    %v1514 = vsel %vm550, %v1509, %v1512
    %v1516 = vsel %vm552, %v1514, 0
    %1518 = vmatpush.msra.mxu0 0.0
    %1519 = vmatpush.msra.mxu0 0.0
    %1520 = vmatpush.msra.mxu0 0.0
    %1521 = vmatpush.msra.mxu0 0.0
    %1522 = vmatpush.msra.mxu0 0.0
    %1523 = vmatpush.msra.mxu0 0.0
    %1524 = vmatpush.msra.mxu0 0.0
    %1525 = vmatpush.msra.mxu0 0.0
    %1526 = vmatpush.msra.mxu0 %v438
    %1527 = vmatpush.msra.mxu0 %v436
    %1528 = vmatpush.msra.mxu0 %v434
    %1529 = vmatpush.msra.mxu0 %v432
    %1530 = vmatpush.msra.mxu0 %v430
    %1531 = vmatpush.msra.mxu0 %v428
    %1532 = vmatpush.msra.mxu0 %v426
    %1533 = vmatpush.msra.mxu0 %v424
    %1534 = vmatmul.f32.gmra.mxu0 %v1516
    %v1535 = vpop.f32.mrf.mxu0
    %v1536 = vadd.f32 0.0, %v1535
    %1537 = vdwg.mxu0
    %1538 = vmatpush.msra.mxu0 0.0
    %1539 = vmatpush.msra.mxu0 0.0
    %1540 = vmatpush.msra.mxu0 0.0
    %1541 = vmatpush.msra.mxu0 0.0
    %1542 = vmatpush.msra.mxu0 0.0
    %1543 = vmatpush.msra.mxu0 0.0
    %1544 = vmatpush.msra.mxu0 0.0
    %1545 = vmatpush.msra.mxu0 0.0
    %1546 = vmatpush.msra.mxu0 %v439
    %1547 = vmatpush.msra.mxu0 %v437
    %1548 = vmatpush.msra.mxu0 %v435
    %1549 = vmatpush.msra.mxu0 %v433
    %1550 = vmatpush.msra.mxu0 %v431
    %1551 = vmatpush.msra.mxu0 %v429
    %1552 = vmatpush.msra.mxu0 %v427
    %1553 = vmatpush.msra.mxu0 %v425
    %1554 = vmatmul.f32.gmra.mxu0 %v1516
    %v1555 = vpop.f32.mrf.mxu0
    %v1556 = vadd.f32 0.0, %v1555
    %1557 = vdwg.mxu0
    %v1558 = vrot.slane %v396, 6
    %v1559 = vrot.slane %v399, 5
    %v1560 = vsel %vm274, %v1559, %v1558
    %v1562 = vadd.f32 %v1536, %v1560
    %v1563 = vadd.f32 %v1562, %v442
    %v1564 = vrot.slane %v419, 1
    %v1565 = vsel %vm274, %v422, %v1564
    %v1567 = vadd.f32 %v1556, %v1565
    %v1568 = vadd.f32 %v1567, %v480
    %v1569 = vxor.u32 %v1563, 2147483648
    %v1570 = vmul.f32 %v1569, 1.442695
    %v1571 = vpow.pop %v1570
    %v1572 = vadd.f32 %v1571, 1.0
    %v1573 = vrcp.pop %v1572
    %v1574 = vmul.f32 %v1572, %v1573
    %v1575 = vsub.f32 1.0, %v1574
    %v1576 = vmul.f32 %v1573, %v1575
    %v1577 = vadd.f32 %v1573, %v1576
    %vm1578 = vweird.f32 %v1572
    %vm1579 = vweird.f32 %v1573
    %vm1580 = vmor %vm1578, %vm1579
    %v1581 = vsel %vm1580, %v1573, %v1577
    %v1582 = vand.u32 2147483647, %v1572
    %vm1583 = vcmp.eq.f32.partialorder %v1582, 8.507059e+37
    %v1584 = vand.u32 %v1572, 2147483648
    %v1585 = vor.u32 1.1754944e-38, %v1584
    %v1586 = vsel %vm1583, %v1585, %v1581
    %v1587 = vmul.f32 1.0, %v1586
    %v1588 = vtanh.pop %v1563
    %v1589 = vmul.f32 %v1587, %v1440
    %1591 = vrot.lane.b32.xlu0 %v1588, 32
    %v1592 = vpop.permute.xlu0 %1591
    %v1594 = vmul.f32 %v1587, %v1592
    %1596 = vrot.lane.b32.xlu0 %v1594, 32
    %v1597 = vpop.permute.xlu0 %1596
    %v1599 = vadd.f32 %v1589, %v1597
    %v1600 = vtanh.pop %v1599
    %1602 = vrot.lane.b32.xlu0 %v1600, 32
    %v1603 = vpop.permute.xlu0 %1602
    %v1605 = vmul.f32 %v1587, %v1603
    %v1606 = vxor.u32 %v1568, 2147483648
    %v1607 = vmul.f32 %v1606, 1.442695
    %v1608 = vpow.pop %v1607
    %v1609 = vadd.f32 %v1608, 1.0
    %v1610 = vrcp.pop %v1609
    %v1611 = vmul.f32 %v1609, %v1610
    %v1612 = vsub.f32 1.0, %v1611
    %v1613 = vmul.f32 %v1610, %v1612
    %v1614 = vadd.f32 %v1610, %v1613
    %vm1615 = vweird.f32 %v1609
    %vm1616 = vweird.f32 %v1610
    %vm1617 = vmor %vm1615, %vm1616
    %v1618 = vsel %vm1617, %v1610, %v1614
    %v1619 = vand.u32 2147483647, %v1609
    %vm1620 = vcmp.eq.f32.partialorder %v1619, 8.507059e+37
    %v1621 = vand.u32 %v1609, 2147483648
    %v1622 = vor.u32 1.1754944e-38, %v1621
    %v1623 = vsel %vm1620, %v1622, %v1618
    %v1624 = vmul.f32 1.0, %v1623
    %v1625 = vtanh.pop %v1568
    %v1626 = vmul.f32 %v1624, %v1477
    %1628 = vrot.lane.b32.xlu0 %v1625, 32
    %v1629 = vpop.permute.xlu0 %1628
    %v1631 = vmul.f32 %v1624, %v1629
    %1633 = vrot.lane.b32.xlu0 %v1631, 32
    %v1634 = vpop.permute.xlu0 %1633
    %v1636 = vadd.f32 %v1626, %v1634
    %v1637 = vtanh.pop %v1636
    %1639 = vrot.lane.b32.xlu0 %v1637, 32
    %v1640 = vpop.permute.xlu0 %1639
    %v1642 = vmul.f32 %v1624, %v1640
    %v1644 = vrot.slane %v1605, 1
    %v1645 = vperm.slane %v1605, 0
    %v1646 = vperm.slane %v1644, 0
    %1647 = vrot.lane.b32.xlu0 %v1645, 64
    %v1648 = vpop.permute.xlu0 %1647
    %1649 = vrot.lane.b32.xlu0 %v1646, 64
    %v1650 = vpop.permute.xlu0 %1649
    %1653 = vst.msk [vmem:[#allocation2 + $0x7] sm:$0x1] %vm528, %v1648
    %1654 = vst.msk [vmem:[#allocation2 + $0xf] sm:$0x1] %vm528, %v1650
    %v1656 = vrot.slane %v1642, 1
    %v1657 = vperm.slane %v1642, 0
    %v1658 = vperm.slane %v1656, 0
    %1659 = vrot.lane.b32.xlu0 %v1657, 96
    %v1660 = vpop.permute.xlu0 %1659
    %1661 = vrot.lane.b32.xlu0 %v1658, 96
    %v1662 = vpop.permute.xlu0 %1661
    %1665 = vst.msk [vmem:[#allocation2] sm:$0x1] %vm541, %v1660
    %1666 = vst.msk [vmem:[#allocation2 + $0x8] sm:$0x1] %vm541, %v1662
    %v1667 = vld [vmem:[#allocation2] sm:$0xff]
    %v1668 = vld [vmem:[#allocation2 + $0x8] sm:$0xff]
    %v1669 = vld [vmem:[#allocation15] sm:$0xff]
    %1670 = vmatpush.msra.mxu0 0.0
    %1671 = vmatpush.msra.mxu0 0.0
    %1672 = vmatpush.msra.mxu0 0.0
    %1673 = vmatpush.msra.mxu0 0.0
    %1674 = vmatpush.msra.mxu0 0.0
    %1675 = vmatpush.msra.mxu0 0.0
    %1676 = vmatpush.msra.mxu0 0.0
    %1677 = vmatpush.msra.mxu0 0.0
    %1678 = vmatpush.msra.mxu0 0.0
    %1679 = vmatpush.msra.mxu0 0.0
    %1680 = vmatpush.msra.mxu0 0.0
    %1681 = vmatpush.msra.mxu0 0.0
    %1682 = vmatpush.msra.mxu0 0.0
    %1683 = vmatpush.msra.mxu0 0.0
    %1684 = vmatpush.msra.mxu0 0.0
    %1685 = vmatpush.msra.mxu0 %v1669
    %1686 = vmatmul.f32.gmra.mxu0 %v276
    %v1687 = vpop.f32.mrf.mxu0
    %v1688 = vadd.f32 0.0, %v1687
    %1689 = vdwg.mxu0
    %v1690 = vld [vmem:[#allocation16] sm:$0xff]
    %v1691 = vld [vmem:[#allocation16 + $0x8] sm:$0xff]
    %v1692 = vld [vmem:[#allocation16 + $0x10] sm:$0xff]
    %v1693 = vld [vmem:[#allocation16 + $0x18] sm:$0xff]
    %v1694 = vld [vmem:[#allocation16 + $0x20] sm:$0xff]
    %v1695 = vld [vmem:[#allocation16 + $0x28] sm:$0xff]
    %v1696 = vld [vmem:[#allocation16 + $0x30] sm:$0xff]
    %v1697 = vld [vmem:[#allocation16 + $0x38] sm:$0xff]
    %v1699 = vsel %vm552, %v1667, 0
    %v1702 = vsel %vm552, %v1668, 0
    %1704 = vmatpush.msra.mxu0 0.0
    %1705 = vmatpush.msra.mxu0 0.0
    %1706 = vmatpush.msra.mxu0 0.0
    %1707 = vmatpush.msra.mxu0 0.0
    %1708 = vmatpush.msra.mxu0 0.0
    %1709 = vmatpush.msra.mxu0 0.0
    %1710 = vmatpush.msra.mxu0 0.0
    %1711 = vmatpush.msra.mxu0 0.0
    %1712 = vmatpush.msra.mxu0 %v1697
    %1713 = vmatpush.msra.mxu0 %v1696
    %1714 = vmatpush.msra.mxu0 %v1695
    %1715 = vmatpush.msra.mxu0 %v1694
    %1716 = vmatpush.msra.mxu0 %v1693
    %1717 = vmatpush.msra.mxu0 %v1692
    %1718 = vmatpush.msra.mxu0 %v1691
    %1719 = vmatpush.msra.mxu0 %v1690
    %1720 = vmatmul.f32.gmra.mxu0 %v1699
    %v1721 = vpop.f32.mrf.mxu0
    %v1722 = vadd.f32 0.0, %v1721
    %1723 = vmatmul.f32.gmra.mxu0 %v1702
    %v1724 = vpop.f32.mrf.mxu0
    %v1725 = vadd.f32 0.0, %v1724
    %1726 = vdwg.mxu0
    %v1728 = vrot.slane %v1688, 1
    %v1729 = vperm.slane %v1688, 0
    %v1730 = vperm.slane %v1728, 0
    %v1733 = vadd.f32 %v1722, %v1729
    %v1734 = vadd.f32 %v1725, %v1730
    %v1735 = vld [vmem:[%s12] sm:$0x1]
    %v1737 = vperm.slane %v1735, 0
    %v1739 = vadd.f32 %v1733, %v1737
    %v1740 = vadd.f32 %v1734, %v1737
    %v1741 = vtanh.pop %v1739
    %v1742 = vtanh.pop %v1740
    %v1743 = vsel %vm552, %v1741, -inf
    %1744 = vmax.xlane.f32.xlu0 %v1743
    %v1745 = vpop.xlane.xlu0 %1744
    %v1746 = vsel %vm552, %v1742, -inf
    %1747 = vmax.xlane.f32.xlu0 %v1746
    %v1748 = vpop.xlane.xlu0 %1747
    %v1749 = vsub.f32 %v1741, %v1745
    %v1750 = vsub.f32 %v1742, %v1748
    %v1751 = vmul.f32 %v1749, 1.442695
    %v1752 = vpow.pop %v1751
    %v1753 = vmul.f32 %v1750, 1.442695
    %v1754 = vpow.pop %v1753
    %v1755 = vsel %vm552, %v1752, 0.0
    %1756 = vadd.xlane.f32.xlu0 %v1755
    %v1757 = vpop.xlane.xlu0 %1756
    %v1758 = vsel %vm552, %v1754, 0.0
    %1759 = vadd.xlane.f32.xlu0 %v1758
    %v1760 = vpop.xlane.xlu0 %1759
    %v1761 = vrcp.pop %v1757
    %v1762 = vrcp.pop %v1760
    %v1763 = vmul.f32 %v1752, %v1761
    %v1764 = vmul.f32 %v1754, %v1762
    %v1765 = vmul.f32 %v1763, 64.0
    %v1766 = vmul.f32 %v1764, 64.0
    %v1767 = vmul.f32 %v1765, %v1667
    %v1768 = vmul.f32 %v1766, %v1668
    %v1769 = vld [vmem:[%s13] sm:$0x1]
    %v1771 = vperm.slane %v1769, 0
    %v1773 = vmul.f32 %v1767, %v1771
    %v1774 = vmul.f32 %v1768, %v1771
    %v1775 = vsel %vm552, %v1773, 0.0
    %1776 = vadd.xlane.f32.xlu0 %v1775
    %v1777 = vpop.xlane.xlu0 %1776
    %v1778 = vsel %vm552, %v1774, 0.0
    %1779 = vadd.xlane.f32.xlu0 %v1778
    %v1780 = vpop.xlane.xlu0 %1779
    %v1781 = vld [vmem:[#allocation3] sm:$0x1]
    %v1783 = vperm.slane %v1781, 0
    %1784 = vset.pattern.permute.xlu0 0
    %1785 = vperm.xlu0 %1784, %v1783
    %v1786 = vpop.permute.xlu0 %1785
    %v1788 = vadd.f32 %v1777, %v1786
    %v1789 = vadd.f32 %v1780, %v1786
    %v1792 = vperm.slane %v1788, %v195
    %v1793 = vperm.slane %v1789, %v195
    %v1794 = vsel %vm274, %v1793, %v1792
    %vm1796 = vcmask 58368
    %1797 = vst.msk [vmem:[#allocation18] sm:$0x3] %vm1796, %v1794
    // Predicated region
    $region94: #{tpu_custom_call.1} parent=1 // pred_check
      _
    $region95: #{tpu_custom_call.1} parent=1 // pred_check_branch
      %1799 = sbr.rel (0) target = $region97
    $region96: #{tpu_custom_call.1} parent=1 // pred_region
      %1801 = vsyncadd [#allocation6], 0
      %s1803 = sshll.u32 [#allocation18], 4
      %s1804 = int_to_ptr.vmem [resolvable:$true] %s1803
      %s1805 = sshll.u32 %s15, 4
      %s1806 = int_to_ptr.hbm [resolvable:$true] %s1805
      %1808 = dma.vmem_to_hbm [thread:$0]  %s1804, 32, %s1806, [#allocation6]
    $region97: #{tpu_custom_call.1} parent=1 // pred_fallthru
      _
    // Predicated region
    $region98: #{tpu_custom_call.1} parent=1 // pred_check
      _
    $region99: #{tpu_custom_call.1} parent=1 // pred_check_branch
      %1810 = sbr.rel (0) target = $region101
    $region100: #{tpu_custom_call.1} parent=1 // pred_region
      %1812 = dma.done [#allocation6], 32
    $region101: #{tpu_custom_call.1} parent=1 // pred_fallthru
      _
    %1813 = vsyncpa [#allocation5], 1
    %1814 = vsyncpa [#allocation8], 1
    %1815 = vsyncpa [#allocation11], 1
    %1816 = vsyncpa [#allocation14], 1
    %1817 = vsyncpa [#allocation17], 1
    %1818 = vsyncpa [#allocation6], 1

</llo_original>
